<compile_context>
chip_gen: v7x
topology: tpu7x:2x2x1
jax: 0.10.0
libtpu: 0.0.40
codegen_flags: <defaults>
</compile_context>

<pallas_src>
import functools

import jax
import jax.numpy as jnp
from jax import lax
from jax.experimental import pallas as pl
from jax.experimental.pallas import tpu as pltpu

FEATURE_DIM = 512
NUM_CLASSES = 2
HEAD_PAD = 128          # lane-padded width of the finlinear columns inside the fused head


def model_embedding_kernel(x_ref, wf_ref, bf_ref, wcat_ref, bcat_ref,
                           emb_out_ref, out_pad_ref, acc_ref, *, hw_total):
    hw_idx = pl.program_id(1)
    n_hw = pl.num_programs(1)
    block_hw = x_ref.shape[0]            # batch dim is squeezed: x_ref is (block_hw, Cin)

    @pl.when(hw_idx == 0)
    def _():
        acc_ref[...] = jnp.zeros_like(acc_ref)

    # --- features stand-in: 1x1 conv as a single 2-D MXU matmul (bf16 in, f32 acc) ---
    y = jnp.dot(x_ref[...], wf_ref[...], preferred_element_type=jnp.float32)
    y = jnp.maximum(y + bf_ref[...], 0.0)                       # (block_hw, F), f32

    # mask spatial rows beyond the true H*W (partial last tile -> unbiased mean)
    row = hw_idx * block_hw + lax.broadcasted_iota(jnp.int32, (block_hw, 1), 0)
    y = jnp.where(row < hw_total, y, 0.0)

    acc_ref[...] += jnp.sum(y, axis=0, keepdims=True)           # (1, F) f32 running sum

    @pl.when(hw_idx == n_hw - 1)
    def _():
        embedding = acc_ref[...] * (1.0 / hw_total)             # global average pool
        # fused head: one (1,512) @ (512,640) matmul = [linear | padded finlinear]
        head = jnp.dot(embedding, wcat_ref[...],
                       preferred_element_type=jnp.float32) + bcat_ref[...]
        emb_out_ref[...] = jnp.maximum(head[:, :FEATURE_DIM], 0.0)   # relu(linear(emb))
        out_pad_ref[...] = head[:, FEATURE_DIM:]                     # finlinear(emb), lane-padded


def model_embedding_forward(x_nchw, params, *, block_hw=None):
    """x_nchw: (B, C, H, W) float32. Returns (embedding_out (B,512), out (B,2))."""
    B, C, H, W = x_nchw.shape
    HW = H * W

    # NCHW -> NHWC -> (B, HW, C): channels on the lane axis; bf16 halves HBM traffic.
    x = jnp.transpose(x_nchw, (0, 2, 3, 1)).reshape(B, HW, C).astype(jnp.bfloat16)

    wf = params["w_feat"].astype(jnp.bfloat16)
    bf = params["b_feat"].astype(jnp.float32)                   # (1, F), keep f32 (v5e VPU)

    # Fuse linear(512->512) with finlinear(512->2) lane-padded to 128 columns.
    w_fin_pad = jnp.zeros((FEATURE_DIM, HEAD_PAD), jnp.float32)
    w_fin_pad = w_fin_pad.at[:, :NUM_CLASSES].set(params["w_fin"].astype(jnp.float32))
    b_fin_pad = jnp.zeros((1, HEAD_PAD), jnp.float32)
    b_fin_pad = b_fin_pad.at[:, :NUM_CLASSES].set(params["b_fin"].astype(jnp.float32))
    wcat = jnp.concatenate([params["w_lin"].astype(jnp.float32), w_fin_pad], axis=1)
    bcat = jnp.concatenate([params["b_lin"].astype(jnp.float32), b_fin_pad], axis=1)

    # HW tile: sublane-aligned, bounded so the pipeline fits comfortably in VMEM
    # on all of v5e / v6e / v7x (footprint here is well under a MiB per buffer).
    if block_hw is None:
        block_hw = 1024
    block_hw = min(block_hw, HW)
    if block_hw != HW:
        block_hw = max(8, (block_hw // 8) * 8)
    n_hw = pl.cdiv(HW, block_hw)

    kernel = functools.partial(model_embedding_kernel, hw_total=HW)

    flops = 2 * B * HW * C * FEATURE_DIM + 2 * B * FEATURE_DIM * (FEATURE_DIM + HEAD_PAD)
    bytes_accessed = (x.size * 2 + wf.size * 2 + bf.size * 4 + wcat.size * 4
                      + bcat.size * 4 + B * FEATURE_DIM * 4 + B * HEAD_PAD * 4)

    emb_out, out_pad = pl.pallas_call(
        kernel,
        grid_spec=pltpu.PrefetchScalarGridSpec(
            num_scalar_prefetch=0,
            grid=(B, n_hw),                              # HW = trailing reduction axis
            in_specs=[
                pl.BlockSpec((None, block_hw, C), lambda b, h: (b, h, 0)),   # x tile
                pl.BlockSpec((C, FEATURE_DIM), lambda b, h: (0, 0)),         # w_feat
                pl.BlockSpec((1, FEATURE_DIM), lambda b, h: (0, 0)),         # b_feat
                pl.BlockSpec((FEATURE_DIM, FEATURE_DIM + HEAD_PAD),
                             lambda b, h: (0, 0)),                           # fused head W
                pl.BlockSpec((1, FEATURE_DIM + HEAD_PAD), lambda b, h: (0, 0)),  # fused head b
            ],
            out_specs=[
                pl.BlockSpec((None, 1, FEATURE_DIM), lambda b, h: (b, 0, 0)),
                pl.BlockSpec((None, 1, HEAD_PAD), lambda b, h: (b, 0, 0)),
            ],
            scratch_shapes=[pltpu.VMEM((1, FEATURE_DIM), jnp.float32)],      # f32 accumulator
        ),
        out_shape=(
            jax.ShapeDtypeStruct((B, 1, FEATURE_DIM), jnp.float32),
            jax.ShapeDtypeStruct((B, 1, HEAD_PAD), jnp.float32),
        ),
        compiler_params=pltpu.CompilerParams(
            dimension_semantics=("parallel", "arbitrary"),
            vmem_limit_bytes=48 * 1024 * 1024,
        ),
        cost_estimate=pl.CostEstimate(flops=flops, transcendentals=0,
                                      bytes_accessed=bytes_accessed),
    )(x, wf, bf, wcat, bcat)

    embedding_out = emb_out.reshape(B, FEATURE_DIM)
    out = out_pad.reshape(B, HEAD_PAD)[:, :NUM_CLASSES]
    return embedding_out, out


def init_params(key, c_in):
    k = jax.random.split(key, 6)
    scale = 0.02
    return {
        # stand-in backbone params (1x1 conv C_in -> 512)
        "w_feat": scale * jax.random.normal(k[0], (c_in, FEATURE_DIM), jnp.float32),
        "b_feat": scale * jax.random.normal(k[1], (1, FEATURE_DIM), jnp.float32),
        # self.linear = nn.Linear(512, 512)
        "w_lin":  scale * jax.random.normal(k[2], (FEATURE_DIM, FEATURE_DIM), jnp.float32),
        "b_lin":  scale * jax.random.normal(k[3], (1, FEATURE_DIM), jnp.float32),
        # self.finlinear = nn.Linear(512, 2)
        "w_fin":  scale * jax.random.normal(k[4], (FEATURE_DIM, NUM_CLASSES), jnp.float32),
        "b_fin":  scale * jax.random.normal(k[5], (1, NUM_CLASSES), jnp.float32),
    }


if __name__ == "__main__":
    key = jax.random.PRNGKey(0)
    kx, kp = jax.random.split(key)

    B, C, H, W = 2, 4, 16, 16
    x = jax.random.normal(kx, (B, C, H, W), jnp.float32)
    params = init_params(kp, C)

    # block_hw=128 -> 2 HW tiles per batch element: exercises the pipelined
    # accumulate / finalize path even at this small test size.
    emb_out, out = model_embedding_forward(x, params, block_hw=128)
    jax.block_until_ready((emb_out, out))

    # pure-JAX reference (same bf16 rounding of x / w_feat as the kernel uses)
    HW = H * W
    x_flat = jnp.transpose(x, (0, 2, 3, 1)).reshape(B, HW, C)
    x_bf = x_flat.astype(jnp.bfloat16).astype(jnp.float32)
    wf_bf = params["w_feat"].astype(jnp.bfloat16).astype(jnp.float32)
    y_ref = jnp.maximum(
        jnp.einsum('bpc,cf->bpf', x_bf, wf_bf, preferred_element_type=jnp.float32)
        + params["b_feat"][:, None, :], 0.0)
    emb_ref = jnp.mean(y_ref, axis=1)
    emb_out_ref = jnp.maximum(emb_ref @ params["w_lin"] + params["b_lin"], 0.0)
    out_ref = emb_ref @ params["w_fin"] + params["b_fin"]

    assert emb_out.shape == (B, FEATURE_DIM) and out.shape == (B, NUM_CLASSES)
    assert jnp.allclose(emb_out, emb_out_ref, atol=1e-2, rtol=1e-2), \
        float(jnp.max(jnp.abs(emb_out - emb_out_ref)))
    assert jnp.allclose(out, out_ref, atol=1e-2, rtol=1e-2), \
        float(jnp.max(jnp.abs(out - out_ref)))

    print("KERNEL_OK")
</pallas_src>

<mosaic_0001>
module attributes {stable_mosaic.version = 11 : i64} {
  func.func @model_embedding_kernel(%arg0: i32, %arg1: i32, %arg2: memref<1x128x4xbf16, #tpu.memory_space<vmem>>, %arg3: memref<4x512xbf16, #tpu.memory_space<vmem>>, %arg4: memref<1x512xf32, #tpu.memory_space<vmem>>, %arg5: memref<512x640xf32, #tpu.memory_space<vmem>>, %arg6: memref<1x640xf32, #tpu.memory_space<vmem>>, %arg7: memref<1x1x512xf32, #tpu.memory_space<vmem>>, %arg8: memref<1x1x128xf32, #tpu.memory_space<vmem>>, %arg9: memref<1x512xf32, #tpu.memory_space<vmem>>) attributes {dimension_semantics = [#tpu.dimension_semantics<parallel>, #tpu.dimension_semantics<arbitrary>], iteration_bounds = array<i64: 2, 2>, scalar_prefetch = 0 : i64, scratch_operands = 1 : i64, tpu.core_type = #tpu.core_type<tc>, window_params = [{transform_indices = @transform_0, window_bounds = array<i64: 1, 128, 4>}, {pipeline_mode = #tpu.pipeline_mode<synchronous>, transform_indices = @transform_1, window_bounds = array<i64: 4, 512>}, {pipeline_mode = #tpu.pipeline_mode<synchronous>, transform_indices = @transform_2, window_bounds = array<i64: 1, 512>}, {pipeline_mode = #tpu.pipeline_mode<synchronous>, transform_indices = @transform_3, window_bounds = array<i64: 512, 640>}, {pipeline_mode = #tpu.pipeline_mode<synchronous>, transform_indices = @transform_4, window_bounds = array<i64: 1, 640>}, {transform_indices = @transform_5, window_bounds = array<i64: 1, 1, 512>}, {transform_indices = @transform_6, window_bounds = array<i64: 1, 1, 128>}]} {
    %c0_i32 = arith.constant 0 : i32
    %0 = arith.cmpi eq, %arg1, %c0_i32 : i32
    %1 = arith.extui %0 : i1 to i32
    %c0_i32_0 = arith.constant 0 : i32
    %2 = arith.cmpi ne, %1, %c0_i32_0 : i32
    scf.if %2 {
      %cst_15 = arith.constant 0.000000e+00 : f32
      %30 = vector.broadcast %cst_15 : f32 to vector<1x512xf32>
      %c0_16 = arith.constant 0 : index
      %c0_17 = arith.constant 0 : index
      %31 = vector.load %arg9[%c0_16, %c0_17] : memref<1x512xf32, #tpu.memory_space<vmem>>, vector<1x512xf32>
      tpu.vector_store %arg9[%c0_16, %c0_17], %30 {strides = array<i32>} : memref<1x512xf32, #tpu.memory_space<vmem>>, vector<1x512xf32>,
    } else {
    }
    %c0 = arith.constant 0 : index
    %c0_1 = arith.constant 0 : index
    %c0_2 = arith.constant 0 : index
    %3 = vector.load %arg2[%c0, %c0_1, %c0_2] : memref<1x128x4xbf16, #tpu.memory_space<vmem>>, vector<1x128x4xbf16>
    %4 = vector.shape_cast %3 : vector<1x128x4xbf16> to vector<128x4xbf16>
    %c0_3 = arith.constant 0 : index
    %c0_4 = arith.constant 0 : index
    %5 = vector.load %arg3[%c0_3, %c0_4] : memref<4x512xbf16, #tpu.memory_space<vmem>>, vector<4x512xbf16>
    %cst = arith.constant dense<0.000000e+00> : vector<128x512xf32>
    %6 = tpu.matmul %4, %5, %cst {dimension_numbers = #tpu.dot_dimension_numbers<[1], [0], [0], [1], [0, 0, 1, 1], [], []>} : vector<128x4xbf16>, vector<4x512xbf16>, vector<128x512xf32> -> vector<128x512xf32>
    %c0_5 = arith.constant 0 : index
    %c0_6 = arith.constant 0 : index
    %7 = vector.load %arg4[%c0_5, %c0_6] : memref<1x512xf32, #tpu.memory_space<vmem>>, vector<1x512xf32>
    %8 = vector.broadcast %7 : vector<1x512xf32> to vector<128x512xf32>
    %9 = arith.addf %6, %8 : vector<128x512xf32>
    %cst_7 = arith.constant 0.000000e+00 : f32
    %10 = vector.broadcast %cst_7 : f32 to vector<128x512xf32>
    %11 = arith.maximumf %9, %10 : vector<128x512xf32>
    %c128_i32 = arith.constant 128 : i32
    %12 = arith.muli %arg1, %c128_i32 : i32
    %13 = tpu.iota {dimensions = array<i32: 0>} : vector<128x1xi32>
    %14 = vector.broadcast %12 : i32 to vector<128x1xi32>
    %15 = arith.addi %14, %13 : vector<128x1xi32>
    %c256_i32 = arith.constant 256 : i32
    %16 = vector.broadcast %c256_i32 : i32 to vector<128x1xi32>
    %17 = arith.cmpi slt, %15, %16 : vector<128x1xi32>
    %cst_8 = arith.constant 0.000000e+00 : f32
    %18 = vector.shape_cast %17 : vector<128x1xi1> to vector<128x1xi1>
    %19 = vector.broadcast %18 : vector<128x1xi1> to vector<128x512xi1>
    %20 = vector.broadcast %cst_8 : f32 to vector<128x512xf32>
    %21 = arith.select %19, %11, %20 : vector<128x512xi1>, vector<128x512xf32>
    %c0_9 = arith.constant 0 : index
    %c0_10 = arith.constant 0 : index
    %22 = vector.load %arg9[%c0_9, %c0_10] : memref<1x512xf32, #tpu.memory_space<vmem>>, vector<1x512xf32>
    %cst_11 = arith.constant dense<0.000000e+00> : vector<512xf32>
    %23 = vector.multi_reduction <add>, %21, %cst_11 [0] : vector<128x512xf32> to vector<512xf32>
    %24 = vector.shape_cast %23 : vector<512xf32> to vector<1x512xf32>
    %25 = arith.addf %22, %24 : vector<1x512xf32>
    %c0_12 = arith.constant 0 : index
    %c0_13 = arith.constant 0 : index
    %26 = vector.load %arg9[%c0_12, %c0_13] : memref<1x512xf32, #tpu.memory_space<vmem>>, vector<1x512xf32>
    tpu.vector_store %arg9[%c0_12, %c0_13], %25 {strides = array<i32>} : memref<1x512xf32, #tpu.memory_space<vmem>>, vector<1x512xf32>,
    %c1_i32 = arith.constant 1 : i32
    %27 = arith.cmpi eq, %arg1, %c1_i32 : i32
    %28 = arith.extui %27 : i1 to i32
    %c0_i32_14 = arith.constant 0 : i32
    %29 = arith.cmpi ne, %28, %c0_i32_14 : i32
    scf.if %29 {
      %c0_15 = arith.constant 0 : index
      %c0_16 = arith.constant 0 : index
      %30 = vector.load %arg9[%c0_15, %c0_16] : memref<1x512xf32, #tpu.memory_space<vmem>>, vector<1x512xf32>
      %cst_17 = arith.constant 3.906250e-03 : f32
      %31 = vector.broadcast %cst_17 : f32 to vector<1x512xf32>
      %32 = arith.mulf %30, %31 : vector<1x512xf32>
      %c0_18 = arith.constant 0 : index
      %c0_19 = arith.constant 0 : index
      %33 = vector.load %arg5[%c0_18, %c0_19] : memref<512x640xf32, #tpu.memory_space<vmem>>, vector<512x640xf32>
      %cst_20 = arith.constant dense<0.000000e+00> : vector<1x640xf32>
      %34 = tpu.matmul %32, %33, %cst_20 {dimension_numbers = #tpu.dot_dimension_numbers<[1], [0], [0], [1], [0, 0, 1, 1], [], []>} : vector<1x512xf32>, vector<512x640xf32>, vector<1x640xf32> -> vector<1x640xf32>
      %c0_21 = arith.constant 0 : index
      %c0_22 = arith.constant 0 : index
      %35 = vector.load %arg6[%c0_21, %c0_22] : memref<1x640xf32, #tpu.memory_space<vmem>>, vector<1x640xf32>
      %36 = arith.addf %34, %35 : vector<1x640xf32>
      %37 = vector.extract_strided_slice %36 {offsets = [0, 0], sizes = [1, 512], strides = [1, 1]} : vector<1x640xf32> to vector<1x512xf32>
      %cst_23 = arith.constant 0.000000e+00 : f32
      %38 = vector.broadcast %cst_23 : f32 to vector<1x512xf32>
      %39 = arith.maximumf %37, %38 : vector<1x512xf32>
      %c0_24 = arith.constant 0 : index
      %c0_25 = arith.constant 0 : index
      %c0_26 = arith.constant 0 : index
      %40 = vector.load %arg7[%c0_24, %c0_25, %c0_26] : memref<1x1x512xf32, #tpu.memory_space<vmem>>, vector<1x1x512xf32>
      %41 = vector.shape_cast %40 : vector<1x1x512xf32> to vector<1x512xf32>
      %42 = vector.shape_cast %39 : vector<1x512xf32> to vector<1x1x512xf32>
      tpu.vector_store %arg7[%c0_24, %c0_25, %c0_26], %42 {strides = array<i32>} : memref<1x1x512xf32, #tpu.memory_space<vmem>>, vector<1x1x512xf32>,
      %43 = vector.extract_strided_slice %36 {offsets = [0, 512], sizes = [1, 128], strides = [1, 1]} : vector<1x640xf32> to vector<1x128xf32>
      %c0_27 = arith.constant 0 : index
      %c0_28 = arith.constant 0 : index
      %c0_29 = arith.constant 0 : index
      %44 = vector.load %arg8[%c0_27, %c0_28, %c0_29] : memref<1x1x128xf32, #tpu.memory_space<vmem>>, vector<1x1x128xf32>
      %45 = vector.shape_cast %44 : vector<1x1x128xf32> to vector<1x128xf32>
      %46 = vector.shape_cast %43 : vector<1x128xf32> to vector<1x1x128xf32>
      tpu.vector_store %arg8[%c0_27, %c0_28, %c0_29], %46 {strides = array<i32>} : memref<1x1x128xf32, #tpu.memory_space<vmem>>, vector<1x1x128xf32>,
    } else {
    }
    return
  }
  func.func @transform_0(%arg0: i32, %arg1: i32) -> (i32, i32, i32) {
    %c0_i32 = arith.constant 0 : i32
    %c0_i32_0 = arith.constant 0 : i32
    return %arg0, %arg1, %c0_i32 : i32, i32, i32
  }
  func.func @transform_1(%arg0: i32, %arg1: i32) -> (i32, i32) {
    %c0_i32 = arith.constant 0 : i32
    %c0_i32_0 = arith.constant 0 : i32
    %c0_i32_1 = arith.constant 0 : i32
    return %c0_i32, %c0_i32_0 : i32, i32
  }
  func.func @transform_2(%arg0: i32, %arg1: i32) -> (i32, i32) {
    %c0_i32 = arith.constant 0 : i32
    %c0_i32_0 = arith.constant 0 : i32
    %c0_i32_1 = arith.constant 0 : i32
    return %c0_i32, %c0_i32_0 : i32, i32
  }
  func.func @transform_3(%arg0: i32, %arg1: i32) -> (i32, i32) {
    %c0_i32 = arith.constant 0 : i32
    %c0_i32_0 = arith.constant 0 : i32
    %c0_i32_1 = arith.constant 0 : i32
    return %c0_i32, %c0_i32_0 : i32, i32
  }
  func.func @transform_4(%arg0: i32, %arg1: i32) -> (i32, i32) {
    %c0_i32 = arith.constant 0 : i32
    %c0_i32_0 = arith.constant 0 : i32
    %c0_i32_1 = arith.constant 0 : i32
    return %c0_i32, %c0_i32_0 : i32, i32
  }
  func.func @transform_5(%arg0: i32, %arg1: i32) -> (i32, i32, i32) {
    %c0_i32 = arith.constant 0 : i32
    %c0_i32_0 = arith.constant 0 : i32
    %c0_i32_1 = arith.constant 0 : i32
    return %arg0, %c0_i32, %c0_i32_0 : i32, i32, i32
  }
  func.func @transform_6(%arg0: i32, %arg1: i32) -> (i32, i32, i32) {
    %c0_i32 = arith.constant 0 : i32
    %c0_i32_0 = arith.constant 0 : i32
    %c0_i32_1 = arith.constant 0 : i32
    return %arg0, %c0_i32, %c0_i32_0 : i32, i32, i32
  }
}

</mosaic_0001>

<llo_original>
// kernel: tpu_custom_call.1
$region0: #{tpu_custom_call.1}
  #allocation0 [shape = 'u32[]', space=smem, size = 0x4, offset = 0x4, fixed_abs, tag = 'smem constant byte address 0x4 - core index']
  #allocation1 [shape = 'u32[144,128]{1,0:T(1,128)}', space=vmem, size = 0x12000, scoped, tag = 'internal scratch']
  #allocation2 [shape = 'f32[1,512]{1,0:T(1,128)}', space=vmem, size = 0x800, scoped, tag = 'scratch operand']
  %s0 = inlined_call_operand.vmem [shape: bf16[2,256,4], index: 0, kind: input, shape index: {}]
  %s1 = inlined_call_operand.hbm [shape: bf16[4,512], index: 1, kind: input, shape index: {}]
  %s2 = inlined_call_operand.hbm [shape: f32[1,512], index: 2, kind: input, shape index: {}]
  %s3 = inlined_call_operand.hbm [shape: f32[512,640], index: 3, kind: input, shape index: {}]
  %s4 = inlined_call_operand.hbm [shape: f32[1,640], index: 4, kind: input, shape index: {}]
  %s5 = inlined_call_operand.hbm [shape: f32[2,1,512], index: 5, kind: output, shape index: {0}]
  %s6 = inlined_call_operand.hbm [shape: f32[2,1,128], index: 6, kind: output, shape index: {1}]
  %7 = xla_tuple %s5, %s6
  %s8 = sld [smem:[#allocation0]]
  $region85: #{tpu_custom_call.1} parent=0
    _
  %s10 = ssub.s32 1, %s8
  %s11 = scalar_select 0, %s10, %s8
  $region1: #{tpu_custom_call.1} parent=0
    #allocation3 [shape = 'u8[4096]{0}', space=vmem, size = 0x1000, scoped, tag = 'input window, operand 1, single buffered']
    #allocation4 [shape = 's32[2]{0}', space=sflag, size = 0x8, scoped, tag = 'scoped memory for tpu_custom_call.1']
    #allocation5 [shape = 's32[2]{0}', space=sflag, size = 0x8, scoped, tag = 'scoped memory for tpu_custom_call.1']
    #allocation6 [shape = 'u8[2048]{0}', space=vmem, size = 0x800, scoped, tag = 'input window, operand 2, single buffered']
    #allocation7 [shape = 's32[1]{0}', space=sflag, size = 0x4, scoped, tag = 'scoped memory for tpu_custom_call.1']
    #allocation8 [shape = 'u8[1310720]{0}', space=vmem, size = 0x140000, scoped, tag = 'input window, operand 3, single buffered']
    #allocation9 [shape = 'u8[2560]{0}', space=vmem, size = 0xc00, scoped, tag = 'input window, operand 4, single buffered']
    #allocation10 [shape = 's32[1]{0}', space=sflag, size = 0x4, scoped, tag = 'scoped memory for tpu_custom_call.1']
    #allocation11 [shape = 'u8[4096]{0}', space=vmem, size = 0x1000, scoped, tag = 'output window, operand 0']
    #allocation12 [shape = 'u8[1024]{0}', space=vmem, size = 0x400, scoped, tag = 'output window, operand 1']
    #allocation13 [shape = 's32[2]{0}', space=sflag, size = 0x8, scoped, tag = 'scoped memory for tpu_custom_call.1']
    %12 = vsyncpa [#allocation4], 0
    %13 = vsyncpa [#allocation7], 0
    %14 = vsyncpa [#allocation10], 0
    %15 = vsyncpa [#allocation5], 0
    %s16 = scalar_lea.sflag [#allocation5], 1
    %17 = vsyncpa %s16, 0
    %18 = vsyncpa [#allocation13], 0
    %s19 = scalar_lea.sflag [#allocation13], 1
    %20 = vsyncpa %s19, 0
    loop: start=0, step=1, limit=6
    $region2: #{tpu_custom_call.1} parent=1 // loop_pre_header
      _
    $region3: #{tpu_custom_call.1} parent=1 // loop_header
      %s22 = sphi 0, %s26
      %p23 = scmp.ge.s32.totalorder %s22, 6
      %s29 = sphi 0, %s41
      %s30 = sphi 0, %s37
      %s31 = sphi 0, %s29
      %s32 = sphi 0, %s30
      %s33 = sphi 0, %s31
      %s34 = sphi 0, %s32
      %s46 = sphi 0, %s48
      %s49 = sphi 0, %s46
      %s50 = sphi 0, %s49
      %s66 = sphi 0, %s50
      %s70 = sphi 0, %s70
      %s72 = sphi 0, %s70
      %s73 = sphi 0, %s72
      %s87 = sphi 0, %s73
      %s91 = sphi 0, %s91
      %s93 = sphi 0, %s91
      %s94 = sphi 0, %s93
      %s108 = sphi 0, %s94
      %s112 = sphi 0, %s112
      %s114 = sphi 0, %s112
      %s115 = sphi 0, %s114
      %s129 = sphi 0, %s115
      %s133 = sphi 0, %s133
      %s135 = sphi 0, %s133
      %s136 = sphi 0, %s135
      %s150 = sphi 0, %s136
      %s156 = sphi 0, %s158
      %s159 = sphi 0, %s156
      %s160 = sphi 0, %s159
      %s176 = sphi 0, %s160
      %s182 = sphi 0, %s184
      %s185 = sphi 0, %s182
      %s186 = sphi 0, %s185
      %s202 = sphi 0, %s186
    $region4: #{tpu_custom_call.1} parent=1 // loop_header_branch
      %25 = sbr.rel (%p23) target = $region8
    $region5: #{tpu_custom_call.1} parent=1 // loop_body
      %s27 = ssub.s32 %s22, 1
      %s28 = ssub.s32 %s22, 2
      %s35 = sadd.s32 1, %s30
      %p36 = scmp.ge.s32.totalorder %s35, 2
      %s37 = scalar_select %p36, 0, %s35
      %s38 = sadd.s32 1, %s29
      %s39 = scalar_select %p36, %s38, %s29
      %p40 = scmp.ge.s32.totalorder %s39, 2
      %s41 = scalar_select %p40, 0, %s39
      %s42 = ssub.s32 %s29, %s41
      %s43 = ssub.s32 %s30, %s37
      %s44 = sor.u32 %s42, %s43
      %p45 = scmp.eq.s32.totalorder %s44, 0
      %s47 = sadd.s32 %s46, 1
      %s48 = scalar_select %p45, %s46, %s47
      %p51 = pneg %p45
      %p52 = scmp.eq.s32.totalorder %s22, 3
      %p53 = por %p51, %p52
      %p54 = scmp.ne.s32.totalorder %s46, %s49
      %p55 = scmp.eq.s32.totalorder %s22, 0
      %p56 = por %p54, %p55
      %p57 = scmp.ne.s32.totalorder %s46, %s49
      %p58 = scmp.eq.s32.totalorder %s27, 3
      %p59 = por %p57, %p58
      %p60 = scmp.ne.s32.totalorder %s49, %s50
      %p61 = scmp.eq.s32.totalorder %s27, 0
      %p62 = por %p60, %p61
      %p63 = scmp.ne.s32.totalorder %s49, %s50
      %p64 = scmp.eq.s32.totalorder %s28, 3
      %p65 = por %p63, %p64
      %p67 = scmp.ne.s32.totalorder %s50, %s66
      %p68 = scmp.eq.s32.totalorder %s28, 0
      %p69 = por %p67, %p68
      %s71 = sadd.s32 %s70, 1
      %p74 = scmp.eq.s32.totalorder %s22, 3
      %p75 = scmp.ne.s32.totalorder %s70, %s72
      %p76 = scmp.eq.s32.totalorder %s22, 0
      %p77 = por %p75, %p76
      %p78 = scmp.ne.s32.totalorder %s70, %s72
      %p79 = scmp.eq.s32.totalorder %s27, 3
      %p80 = por %p78, %p79
      %p81 = scmp.ne.s32.totalorder %s72, %s73
      %p82 = scmp.eq.s32.totalorder %s27, 0
      %p83 = por %p81, %p82
      %p84 = scmp.ne.s32.totalorder %s72, %s73
      %p85 = scmp.eq.s32.totalorder %s28, 3
      %p86 = por %p84, %p85
      %p88 = scmp.ne.s32.totalorder %s73, %s87
      %p89 = scmp.eq.s32.totalorder %s28, 0
      %p90 = por %p88, %p89
      %s92 = sadd.s32 %s91, 1
      %p95 = scmp.eq.s32.totalorder %s22, 3
      %p96 = scmp.ne.s32.totalorder %s91, %s93
      %p97 = scmp.eq.s32.totalorder %s22, 0
      %p98 = por %p96, %p97
      %p99 = scmp.ne.s32.totalorder %s91, %s93
      %p100 = scmp.eq.s32.totalorder %s27, 3
      %p101 = por %p99, %p100
      %p102 = scmp.ne.s32.totalorder %s93, %s94
      %p103 = scmp.eq.s32.totalorder %s27, 0
      %p104 = por %p102, %p103
      %p105 = scmp.ne.s32.totalorder %s93, %s94
      %p106 = scmp.eq.s32.totalorder %s28, 3
      %p107 = por %p105, %p106
      %p109 = scmp.ne.s32.totalorder %s94, %s108
      %p110 = scmp.eq.s32.totalorder %s28, 0
      %p111 = por %p109, %p110
      %s113 = sadd.s32 %s112, 1
      %p116 = scmp.eq.s32.totalorder %s22, 3
      %p117 = scmp.ne.s32.totalorder %s112, %s114
      %p118 = scmp.eq.s32.totalorder %s22, 0
      %p119 = por %p117, %p118
      %p120 = scmp.ne.s32.totalorder %s112, %s114
      %p121 = scmp.eq.s32.totalorder %s27, 3
      %p122 = por %p120, %p121
      %p123 = scmp.ne.s32.totalorder %s114, %s115
      %p124 = scmp.eq.s32.totalorder %s27, 0
      %p125 = por %p123, %p124
      %p126 = scmp.ne.s32.totalorder %s114, %s115
      %p127 = scmp.eq.s32.totalorder %s28, 3
      %p128 = por %p126, %p127
      %p130 = scmp.ne.s32.totalorder %s115, %s129
      %p131 = scmp.eq.s32.totalorder %s28, 0
      %p132 = por %p130, %p131
      %s134 = sadd.s32 %s133, 1
      %p137 = scmp.eq.s32.totalorder %s22, 3
      %p138 = scmp.ne.s32.totalorder %s133, %s135
      %p139 = scmp.eq.s32.totalorder %s22, 0
      %p140 = por %p138, %p139
      %p141 = scmp.ne.s32.totalorder %s133, %s135
      %p142 = scmp.eq.s32.totalorder %s27, 3
      %p143 = por %p141, %p142
      %p144 = scmp.ne.s32.totalorder %s135, %s136
      %p145 = scmp.eq.s32.totalorder %s27, 0
      %p146 = por %p144, %p145
      %p147 = scmp.ne.s32.totalorder %s135, %s136
      %p148 = scmp.eq.s32.totalorder %s28, 3
      %p149 = por %p147, %p148
      %p151 = scmp.ne.s32.totalorder %s136, %s150
      %p152 = scmp.eq.s32.totalorder %s28, 0
      %p153 = por %p151, %p152
      %s154 = ssub.s32 %s29, %s41
      %p155 = scmp.eq.s32.totalorder %s154, 0
      %s157 = sadd.s32 %s156, 1
      %s158 = scalar_select %p155, %s156, %s157
      %p161 = pneg %p155
      %p162 = scmp.eq.s32.totalorder %s22, 3
      %p163 = por %p161, %p162
      %p164 = scmp.ne.s32.totalorder %s156, %s159
      %p165 = scmp.eq.s32.totalorder %s22, 0
      %p166 = por %p164, %p165
      %p167 = scmp.ne.s32.totalorder %s156, %s159
      %p168 = scmp.eq.s32.totalorder %s27, 3
      %p169 = por %p167, %p168
      %p170 = scmp.ne.s32.totalorder %s159, %s160
      %p171 = scmp.eq.s32.totalorder %s27, 0
      %p172 = por %p170, %p171
      %p173 = scmp.ne.s32.totalorder %s159, %s160
      %p174 = scmp.eq.s32.totalorder %s28, 3
      %p175 = por %p173, %p174
      %p177 = scmp.ne.s32.totalorder %s160, %s176
      %p178 = scmp.eq.s32.totalorder %s28, 0
      %p179 = por %p177, %p178
      %s180 = ssub.s32 %s29, %s41
      %p181 = scmp.eq.s32.totalorder %s180, 0
      %s183 = sadd.s32 %s182, 1
      %s184 = scalar_select %p181, %s182, %s183
      %p187 = pneg %p181
      %p188 = scmp.eq.s32.totalorder %s22, 3
      %p189 = por %p187, %p188
      %p190 = scmp.ne.s32.totalorder %s182, %s185
      %p191 = scmp.eq.s32.totalorder %s22, 0
      %p192 = por %p190, %p191
      %p193 = scmp.ne.s32.totalorder %s182, %s185
      %p194 = scmp.eq.s32.totalorder %s27, 3
      %p195 = por %p193, %p194
      %p196 = scmp.ne.s32.totalorder %s185, %s186
      %p197 = scmp.eq.s32.totalorder %s27, 0
      %p198 = por %p196, %p197
      %p199 = scmp.ne.s32.totalorder %s185, %s186
      %p200 = scmp.eq.s32.totalorder %s28, 3
      %p201 = por %p199, %p200
      %p203 = scmp.ne.s32.totalorder %s186, %s202
      %p204 = scmp.eq.s32.totalorder %s28, 0
      %p205 = por %p203, %p204
      %p206 = scmp.le.s32.totalorder 1, %s22
      %p207 = scmp.lt.s32.totalorder %s22, 5
      %p208 = pnand %p206, %p207
      %p209 = pneg %p208
      // Predicated region
      $region9: #{tpu_custom_call.1} parent=5 // pred_check
        _
      $region10: #{tpu_custom_call.1} parent=5 // pred_check_branch
        %211 = sbr.rel (%p208) target = $region12
      $region11: #{tpu_custom_call.1} parent=5 // pred_region
        %s212 = ssub.s32 %s22, 1
        // Predicated region
        $region13: #{tpu_custom_call.1} parent=11 // pred_check
          %p213 = pneg %p83
        $region14: #{tpu_custom_call.1} parent=11 // pred_check_branch
          %215 = sbr.rel (%p213) target = $region16
        $region15: #{tpu_custom_call.1} parent=11 // pred_region
          %s217 = ssub.s32 128, 128
          %218 = vsyncadd [#allocation4], %s217
          %s220 = sshll.u32 [#allocation3], 4
          %s221 = int_to_ptr.vmem [resolvable:$true] %s220
          %223 = dma.hbm_to_vmem [thread:$0]  %s1, 128, %s221, [#allocation4]
        $region16: #{tpu_custom_call.1} parent=11 // pred_fallthru
          _
        // Predicated region
        $region17: #{tpu_custom_call.1} parent=11 // pred_check
          %p224 = pneg %p104
        $region18: #{tpu_custom_call.1} parent=11 // pred_check_branch
          %226 = sbr.rel (%p224) target = $region20
        $region19: #{tpu_custom_call.1} parent=11 // pred_region
          %s228 = ssub.s32 64, 64
          %229 = vsyncadd [#allocation7], %s228
          %s231 = sshll.u32 [#allocation6], 4
          %s232 = int_to_ptr.vmem [resolvable:$true] %s231
          %234 = dma.hbm_to_vmem [thread:$0]  %s2, 64, %s232, [#allocation7]
        $region20: #{tpu_custom_call.1} parent=11 // pred_fallthru
          _
        // Predicated region
        $region21: #{tpu_custom_call.1} parent=11 // pred_check
          %p235 = pneg %p125
        $region22: #{tpu_custom_call.1} parent=11 // pred_check_branch
          %237 = sbr.rel (%p235) target = $region24
        $region23: #{tpu_custom_call.1} parent=11 // pred_region
          %s239 = ssub.s32 40960, 40960
          %240 = vsyncadd [#allocation7], %s239
          %s241 = sshll.u32 [#allocation8], 4
          %s242 = int_to_ptr.vmem [resolvable:$true] %s241
          %247 = dma.hbm_to_vmem [thread:$0]  %s3, 40960, %s242, [#allocation7], 640, 640, 40
        $region24: #{tpu_custom_call.1} parent=11 // pred_fallthru
          _
        // Predicated region
        $region25: #{tpu_custom_call.1} parent=11 // pred_check
          %p248 = pneg %p146
        $region26: #{tpu_custom_call.1} parent=11 // pred_check_branch
          %250 = sbr.rel (%p248) target = $region28
        $region27: #{tpu_custom_call.1} parent=11 // pred_region
          %s252 = ssub.s32 80, 80
          %253 = vsyncadd [#allocation10], %s252
          %s255 = sshll.u32 [#allocation9], 4
          %s256 = int_to_ptr.vmem [resolvable:$true] %s255
          %258 = dma.hbm_to_vmem [thread:$0]  %s4, 80, %s256, [#allocation10]
        $region28: #{tpu_custom_call.1} parent=11 // pred_fallthru
          _
      $region12: #{tpu_custom_call.1} parent=5 // pred_fallthru
        _
      %p259 = scmp.lt.s32.totalorder %s22, 4
      // Predicated region
      $region29: #{tpu_custom_call.1} parent=5 // pred_check
        %p260 = pneg %p259
      $region30: #{tpu_custom_call.1} parent=5 // pred_check_branch
        %262 = sbr.rel (%p260) target = $region32
      $region31: #{tpu_custom_call.1} parent=5 // pred_region
        // Predicated region
        $region33: #{tpu_custom_call.1} parent=31 // pred_check
          %p263 = pneg %p56
        $region34: #{tpu_custom_call.1} parent=31 // pred_check_branch
          %265 = sbr.rel (%p263) target = $region36
        $region35: #{tpu_custom_call.1} parent=31 // pred_region
          %s266 = smul.u32 16, %s30
          %p267 = scmp.lt.s32.totalorder %s29, 1
          %s268 = scalar_select %p267, %s29, 1
          %p269 = scmp.lt.s32.totalorder %s266, 31
          %s270 = scalar_select %p269, %s266, 31
          %s271 = smul.addr %s268, 32
          %s272 = sadd.s32 %s270, %s271
          %s273 = smul.addr %s272, 4
          %s274 = scalar_lea.vmem %s0, %s273
          %s275 = smul.u32 16, %s30
        $region36: #{tpu_custom_call.1} parent=31 // pred_fallthru
          _
      $region32: #{tpu_custom_call.1} parent=5 // pred_fallthru
        _
      %p276 = scmp.le.s32.totalorder 1, %s22
      %p277 = scmp.lt.s32.totalorder %s22, 5
      %p278 = pnand %p276, %p277
      %p279 = pneg %p278
      // Predicated region
      $region37: #{tpu_custom_call.1} parent=5 // pred_check
        _
      $region38: #{tpu_custom_call.1} parent=5 // pred_check_branch
        %281 = sbr.rel (%p278) target = $region40
      $region39: #{tpu_custom_call.1} parent=5 // pred_region
        %s282 = ssub.s32 %s22, 1
        // Predicated region
        $region41: #{tpu_custom_call.1} parent=39 // pred_check
          %p283 = pneg %p83
        $region42: #{tpu_custom_call.1} parent=39 // pred_check_branch
          %285 = sbr.rel (%p283) target = $region44
        $region43: #{tpu_custom_call.1} parent=39 // pred_region
          %286 = dma.done [#allocation4], 128
        $region44: #{tpu_custom_call.1} parent=39 // pred_fallthru
          _
        // Predicated region
        $region45: #{tpu_custom_call.1} parent=39 // pred_check
          %p287 = pneg %p104
        $region46: #{tpu_custom_call.1} parent=39 // pred_check_branch
          %289 = sbr.rel (%p287) target = $region48
        $region47: #{tpu_custom_call.1} parent=39 // pred_region
          %290 = dma.done [#allocation7], 64
        $region48: #{tpu_custom_call.1} parent=39 // pred_fallthru
          _
        // Predicated region
        $region49: #{tpu_custom_call.1} parent=39 // pred_check
          %p291 = pneg %p125
        $region50: #{tpu_custom_call.1} parent=39 // pred_check_branch
          %293 = sbr.rel (%p291) target = $region52
        $region51: #{tpu_custom_call.1} parent=39 // pred_region
          %294 = dma.done [#allocation7], 40960
        $region52: #{tpu_custom_call.1} parent=39 // pred_fallthru
          _
        // Predicated region
        $region53: #{tpu_custom_call.1} parent=39 // pred_check
          %p295 = pneg %p146
        $region54: #{tpu_custom_call.1} parent=39 // pred_check_branch
          %297 = sbr.rel (%p295) target = $region56
        $region55: #{tpu_custom_call.1} parent=39 // pred_region
          %298 = dma.done [#allocation10], 80
        $region56: #{tpu_custom_call.1} parent=39 // pred_fallthru
          _
        %s299 = smul.u32 16, %s32
        %p300 = scmp.lt.s32.totalorder %s31, 1
        %s301 = scalar_select %p300, %s31, 1
        %p302 = scmp.lt.s32.totalorder %s299, 31
        %s303 = scalar_select %p302, %s299, 31
        %s304 = smul.addr %s301, 32
        %s305 = sadd.s32 %s303, %s304
        %s306 = smul.addr %s305, 4
        %s307 = scalar_lea.vmem %s0, %s306
        %p308 = pneg %p62
        %p309 = pneg %p59
        %p310 = pneg %p83
        %p311 = pneg %p80
        %p312 = pneg %p104
        %p313 = pneg %p101
        %p314 = pneg %p125
        %p315 = pneg %p122
        %p316 = pneg %p146
        %p317 = pneg %p143
        %p318 = pneg %p172
        %p319 = pneg %p169
        %s320 = sand.u32 %s159, 1
        %s321 = scalar_lea.sflag [#allocation5], %s320
        %s322 = sand.u32 %s159, 1
        %s323 = smul.addr %s322, 4
        %s324 = scalar_lea.vmem [#allocation11], %s323
        %p325 = pneg %p198
        %p326 = pneg %p195
        %s327 = sand.u32 %s185, 1
        %s328 = scalar_lea.sflag [#allocation13], %s327
        %s329 = sand.u32 %s185, 1
        %s330 = scalar_lea.vmem [#allocation12], %s329
        %s331 = smul.u32 16, %s32
        %p332 = scmp.lt.s32.totalorder %s31, 1
        %s333 = scalar_select %p332, %s31, 1
        %p334 = scmp.lt.s32.totalorder %s331, 31
        %s335 = scalar_select %p334, %s331, 31
        %s336 = smul.addr %s333, 32
        %s337 = sadd.s32 %s335, %s336
        %s338 = smul.addr %s337, 4
        %s339 = scalar_lea.vmem %s0, %s338
        %s340 = smul.u32 16, %s32
        %p342 = scmp.eq.s32.totalorder %s32, 0
        // Predicated region
        $region57: #{tpu_custom_call.1} parent=39 // pred_check
          %p343 = pneg %p342
        $region58: #{tpu_custom_call.1} parent=39 // pred_check_branch
          %345 = sbr.rel (%p343) target = $region60
        $region59: #{tpu_custom_call.1} parent=39 // pred_region
          %v346 = vlaneseq
          %vm347 = vcmp.ge.s32.totalorder %v346, 0
          %vm348 = vcmp.lt.s32.totalorder %v346, 512
          %vm349 = vmand %vm347, %vm348
          %350 = vst.msk [vmem:[#allocation2] sm:$0xf] %vm349, 0.0
        $region60: #{tpu_custom_call.1} parent=39 // pred_fallthru
          _
        %v351 = vld [vmem:[%s339] sm:$0xf]
        %v352 = vld [vmem:[%s339 + $0x4] sm:$0xf]
        %v353 = vld [vmem:[%s339 + $0x8] sm:$0xf]
        %v354 = vld [vmem:[%s339 + $0xc] sm:$0xf]
        %v355 = vld [vmem:[%s339 + $0x10] sm:$0xf]
        %v356 = vld [vmem:[%s339 + $0x14] sm:$0xf]
        %v357 = vld [vmem:[%s339 + $0x18] sm:$0xf]
        %v358 = vld [vmem:[%s339 + $0x1c] sm:$0xf]
        %v359 = vld [vmem:[%s339 + $0x20] sm:$0xf]
        %v360 = vld [vmem:[%s339 + $0x24] sm:$0xf]
        %v361 = vld [vmem:[%s339 + $0x28] sm:$0xf]
        %v362 = vld [vmem:[%s339 + $0x2c] sm:$0xf]
        %v363 = vld [vmem:[%s339 + $0x30] sm:$0xf]
        %v364 = vld [vmem:[%s339 + $0x34] sm:$0xf]
        %v365 = vld [vmem:[%s339 + $0x38] sm:$0xf]
        %v366 = vld [vmem:[%s339 + $0x3c] sm:$0xf]
        %v367 = vld [vmem:[#allocation3] sm:$0xff]
        %v368 = vld [vmem:[#allocation6] sm:$0xf]
        %v370 = vlaneseq
        %v371 = vshrl.u32 %v370, 7
        %v372 = vsub.s32 0, %v371
        %v373 = vrot.slane %v368, %v372
        %v374 = vlaneseq
        %v375 = vshrl.u32 %v374, 7
        %v376 = vsub.s32 1, %v375
        %v377 = vrot.slane %v368, %v376
        %v378 = vlaneseq
        %v379 = vshrl.u32 %v378, 7
        %v380 = vsub.s32 2, %v379
        %v381 = vrot.slane %v368, %v380
        %v382 = vlaneseq
        %v383 = vshrl.u32 %v382, 7
        %v384 = vsub.s32 3, %v383
        %v385 = vrot.slane %v368, %v384
        %v406 = vunpack.c.l.b16 %v351
        %v407 = vunpack.c.l.b16 %v352
        %v408 = vunpack.c.l.b16 %v353
        %v409 = vunpack.c.l.b16 %v354
        %v410 = vunpack.c.l.b16 %v355
        %v411 = vunpack.c.l.b16 %v356
        %v412 = vunpack.c.l.b16 %v357
        %v413 = vunpack.c.l.b16 %v358
        %v414 = vunpack.c.l.b16 %v359
        %v415 = vunpack.c.l.b16 %v360
        %v416 = vunpack.c.l.b16 %v361
        %v417 = vunpack.c.l.b16 %v362
        %v418 = vunpack.c.l.b16 %v363
        %v419 = vunpack.c.l.b16 %v364
        %v420 = vunpack.c.l.b16 %v365
        %v421 = vunpack.c.l.b16 %v366
        %v422 = vpack.c.b16 %v407, %v406
        %v423 = vpack.c.b16 %v409, %v408
        %v424 = vpack.c.b16 %v411, %v410
        %v425 = vpack.c.b16 %v413, %v412
        %v426 = vpack.c.b16 %v415, %v414
        %v427 = vpack.c.b16 %v417, %v416
        %v428 = vpack.c.b16 %v419, %v418
        %v429 = vpack.c.b16 %v421, %v420
        %v431 = vcombine.high %v367, %v367
        %v433 = vunpack.c.l.s4 1983009808
        %v434 = vunpack.c.0.s8 %v433
        %v435 = vlaneseq
        %v436 = vshrl.u32 %v435, 7
        %v437 = vsub.s32 %v434, %v436
        %v438 = vrot.slane %v367, %v437
        %v440 = vunpack.c.l.s4 1983009808
        %v441 = vunpack.c.0.s8 %v440
        %v442 = vlaneseq
        %v443 = vshrl.u32 %v442, 7
        %v444 = vsub.s32 %v441, %v443
        %v445 = vrot.slane %v431, %v444
        %v446 = vcombine.high %v438, %v438
        %v447 = vcombine.high %v445, %v445
        %vm448 = vcmask 31744
        %v450 = vsel %vm448, %v422, 0
        %v453 = vsel %vm448, %v423, 0
        %v456 = vsel %vm448, %v424, 0
        %v459 = vsel %vm448, %v425, 0
        %v462 = vsel %vm448, %v426, 0
        %v465 = vsel %vm448, %v427, 0
        %v468 = vsel %vm448, %v428, 0
        %v471 = vsel %vm448, %v429, 0
        %vm473 = vcmask 1041408
        %v475 = vsel %vm473, %v438, 0
        %v478 = vsel %vm473, %v446, 0
        %v481 = vsel %vm473, %v445, 0
        %v484 = vsel %vm473, %v447, 0
        %486 = vmatprep.subr.bf16.mxu0 %v478
        %487 = vmatpush1.bf16.msra.mxu0 %v475
        %488 = vmatprep.subr.bf16.mxu0 0
        %489 = vmatpush1.bf16.msra.mxu0 0
        %490 = vmatprep.subr.bf16.mxu0 0
        %491 = vmatpush1.bf16.msra.mxu0 0
        %492 = vmatprep.subr.bf16.mxu0 0
        %493 = vmatpush1.bf16.msra.mxu0 0
        %494 = vmatprep.subr.bf16.mxu0 0
        %495 = vmatpush1.bf16.msra.mxu0 0
        %496 = vmatprep.subr.bf16.mxu0 0
        %497 = vmatpush1.bf16.msra.mxu0 0
        %498 = vmatprep.subr.bf16.mxu0 0
        %499 = vmatpush1.bf16.msra.mxu0 0
        %500 = vmatprep.subr.bf16.mxu0 0
        %501 = vmatpush1.bf16.msra.mxu0 0
        %502 = vmatprep.subr.bf16.mxu0 0
        %503 = vmatpush1.bf16.msra.mxu0 0
        %504 = vmatprep.subr.bf16.mxu0 0
        %505 = vmatpush1.bf16.msra.mxu0 0
        %506 = vmatprep.subr.bf16.mxu0 0
        %507 = vmatpush1.bf16.msra.mxu0 0
        %508 = vmatprep.subr.bf16.mxu0 0
        %509 = vmatpush1.bf16.msra.mxu0 0
        %510 = vmatprep.subr.bf16.mxu0 0
        %511 = vmatpush1.bf16.msra.mxu0 0
        %512 = vmatprep.subr.bf16.mxu0 0
        %513 = vmatpush1.bf16.msra.mxu0 0
        %514 = vmatprep.subr.bf16.mxu0 0
        %515 = vmatpush1.bf16.msra.mxu0 0
        %516 = vmatprep.subr.bf16.mxu0 0
        %517 = vmatpush1.bf16.msra.mxu0 0
        %518 = vmatprep.mubr.bf16.mxu0 0
        %519 = vmatmul.mubr.bf16.gmra.mrb[0].mxu0 %v450
        %v520 = vpop.f32.mrb[0].mxu0
        %v521 = vadd.f32 %v373, %v520
        %v522 = vpop.f32.mrb[0].mxu0
        %v523 = vadd.f32 %v377, %v522
        %v524 = vpop.f32.mrb[0].mxu0
        %v525 = vadd.f32 %v373, %v524
        %v526 = vpop.f32.mrb[0].mxu0
        %v527 = vadd.f32 %v377, %v526
        %528 = vmatprep.mubr.bf16.mxu0 0
        %529 = vmatmul.mubr.bf16.gmra.mrb[0].mxu0 %v453
        %v530 = vpop.f32.mrb[0].mxu0
        %v531 = vadd.f32 %v373, %v530
        %v532 = vpop.f32.mrb[0].mxu0
        %v533 = vadd.f32 %v377, %v532
        %v534 = vpop.f32.mrb[0].mxu0
        %v535 = vadd.f32 %v373, %v534
        %v536 = vpop.f32.mrb[0].mxu0
        %v537 = vadd.f32 %v377, %v536
        %538 = vmatprep.mubr.bf16.mxu0 0
        %539 = vmatmul.mubr.bf16.gmra.mrb[0].mxu0 %v456
        %v540 = vpop.f32.mrb[0].mxu0
        %v541 = vadd.f32 %v373, %v540
        %v542 = vpop.f32.mrb[0].mxu0
        %v543 = vadd.f32 %v377, %v542
        %v544 = vpop.f32.mrb[0].mxu0
        %v545 = vadd.f32 %v373, %v544
        %v546 = vpop.f32.mrb[0].mxu0
        %v547 = vadd.f32 %v377, %v546
        %548 = vmatprep.mubr.bf16.mxu0 0
        %549 = vmatmul.mubr.bf16.gmra.mrb[0].mxu0 %v459
        %v550 = vpop.f32.mrb[0].mxu0
        %v551 = vadd.f32 %v373, %v550
        %v552 = vpop.f32.mrb[0].mxu0
        %v553 = vadd.f32 %v377, %v552
        %v554 = vpop.f32.mrb[0].mxu0
        %v555 = vadd.f32 %v373, %v554
        %v556 = vpop.f32.mrb[0].mxu0
        %v557 = vadd.f32 %v377, %v556
        %558 = vmatprep.mubr.bf16.mxu0 0
        %559 = vmatmul.mubr.bf16.gmra.mrb[0].mxu0 %v462
        %v560 = vpop.f32.mrb[0].mxu0
        %v561 = vadd.f32 %v373, %v560
        %v562 = vpop.f32.mrb[0].mxu0
        %v563 = vadd.f32 %v377, %v562
        %v564 = vpop.f32.mrb[0].mxu0
        %v565 = vadd.f32 %v373, %v564
        %v566 = vpop.f32.mrb[0].mxu0
        %v567 = vadd.f32 %v377, %v566
        %568 = vmatprep.mubr.bf16.mxu0 0
        %569 = vmatmul.mubr.bf16.gmra.mrb[0].mxu0 %v465
        %v570 = vpop.f32.mrb[0].mxu0
        %v571 = vadd.f32 %v373, %v570
        %v572 = vpop.f32.mrb[0].mxu0
        %v573 = vadd.f32 %v377, %v572
        %v574 = vpop.f32.mrb[0].mxu0
        %v575 = vadd.f32 %v373, %v574
        %v576 = vpop.f32.mrb[0].mxu0
        %v577 = vadd.f32 %v377, %v576
        %578 = vmatprep.mubr.bf16.mxu0 0
        %579 = vmatmul.mubr.bf16.gmra.mrb[0].mxu0 %v468
        %v580 = vpop.f32.mrb[0].mxu0
        %v581 = vadd.f32 %v373, %v580
        %v582 = vpop.f32.mrb[0].mxu0
        %v583 = vadd.f32 %v377, %v582
        %v584 = vpop.f32.mrb[0].mxu0
        %v585 = vadd.f32 %v373, %v584
        %v586 = vpop.f32.mrb[0].mxu0
        %v587 = vadd.f32 %v377, %v586
        %588 = vmatprep.mubr.bf16.mxu0 0
        %589 = vmatmul.mubr.bf16.gmra.mrb[0].mxu0 %v471
        %v590 = vpop.f32.mrb[0].mxu0
        %v591 = vadd.f32 %v373, %v590
        %v592 = vpop.f32.mrb[0].mxu0
        %v593 = vadd.f32 %v377, %v592
        %v594 = vpop.f32.mrb[0].mxu0
        %v595 = vadd.f32 %v373, %v594
        %v596 = vpop.f32.mrb[0].mxu0
        %v597 = vadd.f32 %v377, %v596
        %598 = vdwg.mxu0
        %599 = vmatprep.subr.bf16.mxu0 %v484
        %600 = vmatpush1.bf16.msra.mxu0 %v481
        %601 = vmatprep.subr.bf16.mxu0 0
        %602 = vmatpush1.bf16.msra.mxu0 0
        %603 = vmatprep.subr.bf16.mxu0 0
        %604 = vmatpush1.bf16.msra.mxu0 0
        %605 = vmatprep.subr.bf16.mxu0 0
        %606 = vmatpush1.bf16.msra.mxu0 0
        %607 = vmatprep.subr.bf16.mxu0 0
        %608 = vmatpush1.bf16.msra.mxu0 0
        %609 = vmatprep.subr.bf16.mxu0 0
        %610 = vmatpush1.bf16.msra.mxu0 0
        %611 = vmatprep.subr.bf16.mxu0 0
        %612 = vmatpush1.bf16.msra.mxu0 0
        %613 = vmatprep.subr.bf16.mxu0 0
        %614 = vmatpush1.bf16.msra.mxu0 0
        %615 = vmatprep.subr.bf16.mxu0 0
        %616 = vmatpush1.bf16.msra.mxu0 0
        %617 = vmatprep.subr.bf16.mxu0 0
        %618 = vmatpush1.bf16.msra.mxu0 0
        %619 = vmatprep.subr.bf16.mxu0 0
        %620 = vmatpush1.bf16.msra.mxu0 0
        %621 = vmatprep.subr.bf16.mxu0 0
        %622 = vmatpush1.bf16.msra.mxu0 0
        %623 = vmatprep.subr.bf16.mxu0 0
        %624 = vmatpush1.bf16.msra.mxu0 0
        %625 = vmatprep.subr.bf16.mxu0 0
        %626 = vmatpush1.bf16.msra.mxu0 0
        %627 = vmatprep.subr.bf16.mxu0 0
        %628 = vmatpush1.bf16.msra.mxu0 0
        %629 = vmatprep.subr.bf16.mxu0 0
        %630 = vmatpush1.bf16.msra.mxu0 0
        %631 = vmatprep.mubr.bf16.mxu0 0
        %632 = vmatmul.mubr.bf16.gmra.mrb[0].mxu0 %v450
        %v633 = vpop.f32.mrb[0].mxu0
        %v634 = vadd.f32 %v381, %v633
        %v635 = vpop.f32.mrb[0].mxu0
        %v636 = vadd.f32 %v385, %v635
        %v637 = vpop.f32.mrb[0].mxu0
        %v638 = vadd.f32 %v381, %v637
        %v639 = vpop.f32.mrb[0].mxu0
        %v640 = vadd.f32 %v385, %v639
        %641 = vmatprep.mubr.bf16.mxu0 0
        %642 = vmatmul.mubr.bf16.gmra.mrb[0].mxu0 %v453
        %v643 = vpop.f32.mrb[0].mxu0
        %v644 = vadd.f32 %v381, %v643
        %v645 = vpop.f32.mrb[0].mxu0
        %v646 = vadd.f32 %v385, %v645
        %v647 = vpop.f32.mrb[0].mxu0
        %v648 = vadd.f32 %v381, %v647
        %v649 = vpop.f32.mrb[0].mxu0
        %v650 = vadd.f32 %v385, %v649
        %651 = vmatprep.mubr.bf16.mxu0 0
        %652 = vmatmul.mubr.bf16.gmra.mrb[0].mxu0 %v456
        %v653 = vpop.f32.mrb[0].mxu0
        %v654 = vadd.f32 %v381, %v653
        %v655 = vpop.f32.mrb[0].mxu0
        %v656 = vadd.f32 %v385, %v655
        %v657 = vpop.f32.mrb[0].mxu0
        %v658 = vadd.f32 %v381, %v657
        %v659 = vpop.f32.mrb[0].mxu0
        %v660 = vadd.f32 %v385, %v659
        %661 = vmatprep.mubr.bf16.mxu0 0
        %662 = vmatmul.mubr.bf16.gmra.mrb[0].mxu0 %v459
        %v663 = vpop.f32.mrb[0].mxu0
        %v664 = vadd.f32 %v381, %v663
        %v665 = vpop.f32.mrb[0].mxu0
        %v666 = vadd.f32 %v385, %v665
        %v667 = vpop.f32.mrb[0].mxu0
        %v668 = vadd.f32 %v381, %v667
        %v669 = vpop.f32.mrb[0].mxu0
        %v670 = vadd.f32 %v385, %v669
        %671 = vmatprep.mubr.bf16.mxu0 0
        %672 = vmatmul.mubr.bf16.gmra.mrb[0].mxu0 %v462
        %v673 = vpop.f32.mrb[0].mxu0
        %v674 = vadd.f32 %v381, %v673
        %v675 = vpop.f32.mrb[0].mxu0
        %v676 = vadd.f32 %v385, %v675
        %v677 = vpop.f32.mrb[0].mxu0
        %v678 = vadd.f32 %v381, %v677
        %v679 = vpop.f32.mrb[0].mxu0
        %v680 = vadd.f32 %v385, %v679
        %681 = vmatprep.mubr.bf16.mxu0 0
        %682 = vmatmul.mubr.bf16.gmra.mrb[0].mxu0 %v465
        %v683 = vpop.f32.mrb[0].mxu0
        %v684 = vadd.f32 %v381, %v683
        %v685 = vpop.f32.mrb[0].mxu0
        %v686 = vadd.f32 %v385, %v685
        %v687 = vpop.f32.mrb[0].mxu0
        %v688 = vadd.f32 %v381, %v687
        %v689 = vpop.f32.mrb[0].mxu0
        %v690 = vadd.f32 %v385, %v689
        %691 = vmatprep.mubr.bf16.mxu0 0
        %692 = vmatmul.mubr.bf16.gmra.mrb[0].mxu0 %v468
        %v693 = vpop.f32.mrb[0].mxu0
        %v694 = vadd.f32 %v381, %v693
        %v695 = vpop.f32.mrb[0].mxu0
        %v696 = vadd.f32 %v385, %v695
        %v697 = vpop.f32.mrb[0].mxu0
        %v698 = vadd.f32 %v381, %v697
        %v699 = vpop.f32.mrb[0].mxu0
        %v700 = vadd.f32 %v385, %v699
        %701 = vmatprep.mubr.bf16.mxu0 0
        %702 = vmatmul.mubr.bf16.gmra.mrb[0].mxu0 %v471
        %v703 = vpop.f32.mrb[0].mxu0
        %v704 = vadd.f32 %v381, %v703
        %v705 = vpop.f32.mrb[0].mxu0
        %v706 = vadd.f32 %v385, %v705
        %v707 = vpop.f32.mrb[0].mxu0
        %v708 = vadd.f32 %v381, %v707
        %v709 = vpop.f32.mrb[0].mxu0
        %v710 = vadd.f32 %v385, %v709
        %711 = vdwg.mxu0
        %v712 = vmax.f32 %v521, 0.0
        %v713 = vmax.f32 %v523, 0.0
        %v714 = vmax.f32 %v634, 0.0
        %v715 = vmax.f32 %v636, 0.0
        %v716 = vmax.f32 %v525, 0.0
        %v717 = vmax.f32 %v527, 0.0
        %v718 = vmax.f32 %v638, 0.0
        %v719 = vmax.f32 %v640, 0.0
        %v720 = vmax.f32 %v531, 0.0
        %v721 = vmax.f32 %v533, 0.0
        %v722 = vmax.f32 %v644, 0.0
        %v723 = vmax.f32 %v646, 0.0
        %v724 = vmax.f32 %v535, 0.0
        %v725 = vmax.f32 %v537, 0.0
        %v726 = vmax.f32 %v648, 0.0
        %v727 = vmax.f32 %v650, 0.0
        %v728 = vmax.f32 %v541, 0.0
        %v729 = vmax.f32 %v543, 0.0
        %v730 = vmax.f32 %v654, 0.0
        %v731 = vmax.f32 %v656, 0.0
        %v732 = vmax.f32 %v545, 0.0
        %v733 = vmax.f32 %v547, 0.0
        %v734 = vmax.f32 %v658, 0.0
        %v735 = vmax.f32 %v660, 0.0
        %v736 = vmax.f32 %v551, 0.0
        %v737 = vmax.f32 %v553, 0.0
        %v738 = vmax.f32 %v664, 0.0
        %v739 = vmax.f32 %v666, 0.0
        %v740 = vmax.f32 %v555, 0.0
        %v741 = vmax.f32 %v557, 0.0
        %v742 = vmax.f32 %v668, 0.0
        %v743 = vmax.f32 %v670, 0.0
        %v744 = vmax.f32 %v561, 0.0
        %v745 = vmax.f32 %v563, 0.0
        %v746 = vmax.f32 %v674, 0.0
        %v747 = vmax.f32 %v676, 0.0
        %v748 = vmax.f32 %v565, 0.0
        %v749 = vmax.f32 %v567, 0.0
        %v750 = vmax.f32 %v678, 0.0
        %v751 = vmax.f32 %v680, 0.0
        %v752 = vmax.f32 %v571, 0.0
        %v753 = vmax.f32 %v573, 0.0
        %v754 = vmax.f32 %v684, 0.0
        %v755 = vmax.f32 %v686, 0.0
        %v756 = vmax.f32 %v575, 0.0
        %v757 = vmax.f32 %v577, 0.0
        %v758 = vmax.f32 %v688, 0.0
        %v759 = vmax.f32 %v690, 0.0
        %v760 = vmax.f32 %v581, 0.0
        %v761 = vmax.f32 %v583, 0.0
        %v762 = vmax.f32 %v694, 0.0
        %v763 = vmax.f32 %v696, 0.0
        %v764 = vmax.f32 %v585, 0.0
        %v765 = vmax.f32 %v587, 0.0
        %v766 = vmax.f32 %v698, 0.0
        %v767 = vmax.f32 %v700, 0.0
        %v768 = vmax.f32 %v591, 0.0
        %v769 = vmax.f32 %v593, 0.0
        %v770 = vmax.f32 %v704, 0.0
        %v771 = vmax.f32 %v706, 0.0
        %v772 = vmax.f32 %v595, 0.0
        %v773 = vmax.f32 %v597, 0.0
        %v774 = vmax.f32 %v708, 0.0
        %v775 = vmax.f32 %v710, 0.0
        %s776 = smul.u32 %s32, 128
        %v777 = vlaneseq
        %v778 = vshrl.u32 %v777, 7
        %v779 = vadd.s32 %v778, 8
        %v780 = vadd.s32 %v778, 16
        %v781 = vadd.s32 %v778, 24
        %v782 = vadd.s32 %v778, 32
        %v783 = vadd.s32 %v778, 40
        %v784 = vadd.s32 %v778, 48
        %v785 = vadd.s32 %v778, 56
        %v786 = vadd.s32 %v778, 64
        %v787 = vadd.s32 %v778, 72
        %v788 = vadd.s32 %v778, 80
        %v789 = vadd.s32 %v778, 88
        %v790 = vadd.s32 %v778, 96
        %v791 = vadd.s32 %v778, 104
        %v792 = vadd.s32 %v778, 112
        %v793 = vadd.s32 %v778, 120
        %v794 = vstv %s776
        %v795 = vadd.s32 %v794, %v778
        %v796 = vadd.s32 %v794, %v779
        %v797 = vadd.s32 %v794, %v780
        %v798 = vadd.s32 %v794, %v781
        %v799 = vadd.s32 %v794, %v782
        %v800 = vadd.s32 %v794, %v783
        %v801 = vadd.s32 %v794, %v784
        %v802 = vadd.s32 %v794, %v785
        %v803 = vadd.s32 %v794, %v786
        %v804 = vadd.s32 %v794, %v787
        %v805 = vadd.s32 %v794, %v788
        %v806 = vadd.s32 %v794, %v789
        %v807 = vadd.s32 %v794, %v790
        %v808 = vadd.s32 %v794, %v791
        %v809 = vadd.s32 %v794, %v792
        %v810 = vadd.s32 %v794, %v793
        %vm811 = vcmp.lt.s32.totalorder %v795, 256
        %vm812 = vcmp.lt.s32.totalorder %v796, 256
        %vm813 = vcmp.lt.s32.totalorder %v797, 256
        %vm814 = vcmp.lt.s32.totalorder %v798, 256
        %vm815 = vcmp.lt.s32.totalorder %v799, 256
        %vm816 = vcmp.lt.s32.totalorder %v800, 256
        %vm817 = vcmp.lt.s32.totalorder %v801, 256
        %vm818 = vcmp.lt.s32.totalorder %v802, 256
        %vm819 = vcmp.lt.s32.totalorder %v803, 256
        %vm820 = vcmp.lt.s32.totalorder %v804, 256
        %vm821 = vcmp.lt.s32.totalorder %v805, 256
        %vm822 = vcmp.lt.s32.totalorder %v806, 256
        %vm823 = vcmp.lt.s32.totalorder %v807, 256
        %vm824 = vcmp.lt.s32.totalorder %v808, 256
        %vm825 = vcmp.lt.s32.totalorder %v809, 256
        %vm826 = vcmp.lt.s32.totalorder %v810, 256
        %v827 = vsel %vm811, 1, 0
        %v828 = vsel %vm812, 1, 0
        %v829 = vsel %vm813, 1, 0
        %v830 = vsel %vm814, 1, 0
        %v831 = vsel %vm815, 1, 0
        %v832 = vsel %vm816, 1, 0
        %v833 = vsel %vm817, 1, 0
        %v834 = vsel %vm818, 1, 0
        %v835 = vsel %vm819, 1, 0
        %v836 = vsel %vm820, 1, 0
        %v837 = vsel %vm821, 1, 0
        %v838 = vsel %vm822, 1, 0
        %v839 = vsel %vm823, 1, 0
        %v840 = vsel %vm824, 1, 0
        %v841 = vsel %vm825, 1, 0
        %v842 = vsel %vm826, 1, 0
        %vm843 = vcmp.eq.s32.totalorder %v827, 1
        %vm844 = vcmp.eq.s32.totalorder %v828, 1
        %vm845 = vcmp.eq.s32.totalorder %v829, 1
        %vm846 = vcmp.eq.s32.totalorder %v830, 1
        %vm847 = vcmp.eq.s32.totalorder %v831, 1
        %vm848 = vcmp.eq.s32.totalorder %v832, 1
        %vm849 = vcmp.eq.s32.totalorder %v833, 1
        %vm850 = vcmp.eq.s32.totalorder %v834, 1
        %vm851 = vcmp.eq.s32.totalorder %v835, 1
        %vm852 = vcmp.eq.s32.totalorder %v836, 1
        %vm853 = vcmp.eq.s32.totalorder %v837, 1
        %vm854 = vcmp.eq.s32.totalorder %v838, 1
        %vm855 = vcmp.eq.s32.totalorder %v839, 1
        %vm856 = vcmp.eq.s32.totalorder %v840, 1
        %vm857 = vcmp.eq.s32.totalorder %v841, 1
        %vm858 = vcmp.eq.s32.totalorder %v842, 1
        %v859 = vsel %vm843, %v712, 0.0
        %v860 = vsel %vm843, %v713, 0.0
        %v861 = vsel %vm843, %v714, 0.0
        %v862 = vsel %vm843, %v715, 0.0
        %v863 = vsel %vm844, %v716, 0.0
        %v864 = vsel %vm844, %v717, 0.0
        %v865 = vsel %vm844, %v718, 0.0
        %v866 = vsel %vm844, %v719, 0.0
        %v867 = vsel %vm845, %v720, 0.0
        %v868 = vsel %vm845, %v721, 0.0
        %v869 = vsel %vm845, %v722, 0.0
        %v870 = vsel %vm845, %v723, 0.0
        %v871 = vsel %vm846, %v724, 0.0
        %v872 = vsel %vm846, %v725, 0.0
        %v873 = vsel %vm846, %v726, 0.0
        %v874 = vsel %vm846, %v727, 0.0
        %v875 = vsel %vm847, %v728, 0.0
        %v876 = vsel %vm847, %v729, 0.0
        %v877 = vsel %vm847, %v730, 0.0
        %v878 = vsel %vm847, %v731, 0.0
        %v879 = vsel %vm848, %v732, 0.0
        %v880 = vsel %vm848, %v733, 0.0
        %v881 = vsel %vm848, %v734, 0.0
        %v882 = vsel %vm848, %v735, 0.0
        %v883 = vsel %vm849, %v736, 0.0
        %v884 = vsel %vm849, %v737, 0.0
        %v885 = vsel %vm849, %v738, 0.0
        %v886 = vsel %vm849, %v739, 0.0
        %v887 = vsel %vm850, %v740, 0.0
        %v888 = vsel %vm850, %v741, 0.0
        %v889 = vsel %vm850, %v742, 0.0
        %v890 = vsel %vm850, %v743, 0.0
        %v891 = vsel %vm851, %v744, 0.0
        %v892 = vsel %vm851, %v745, 0.0
        %v893 = vsel %vm851, %v746, 0.0
        %v894 = vsel %vm851, %v747, 0.0
        %v895 = vsel %vm852, %v748, 0.0
        %v896 = vsel %vm852, %v749, 0.0
        %v897 = vsel %vm852, %v750, 0.0
        %v898 = vsel %vm852, %v751, 0.0
        %v899 = vsel %vm853, %v752, 0.0
        %v900 = vsel %vm853, %v753, 0.0
        %v901 = vsel %vm853, %v754, 0.0
        %v902 = vsel %vm853, %v755, 0.0
        %v903 = vsel %vm854, %v756, 0.0
        %v904 = vsel %vm854, %v757, 0.0
        %v905 = vsel %vm854, %v758, 0.0
        %v906 = vsel %vm854, %v759, 0.0
        %v907 = vsel %vm855, %v760, 0.0
        %v908 = vsel %vm855, %v761, 0.0
        %v909 = vsel %vm855, %v762, 0.0
        %v910 = vsel %vm855, %v763, 0.0
        %v911 = vsel %vm856, %v764, 0.0
        %v912 = vsel %vm856, %v765, 0.0
        %v913 = vsel %vm856, %v766, 0.0
        %v914 = vsel %vm856, %v767, 0.0
        %v915 = vsel %vm857, %v768, 0.0
        %v916 = vsel %vm857, %v769, 0.0
        %v917 = vsel %vm857, %v770, 0.0
        %v918 = vsel %vm857, %v771, 0.0
        %v919 = vsel %vm858, %v772, 0.0
        %v920 = vsel %vm858, %v773, 0.0
        %v921 = vsel %vm858, %v774, 0.0
        %v922 = vsel %vm858, %v775, 0.0
        %v923 = vld [vmem:[#allocation2] sm:$0xf]
        %v924 = vadd.f32 %v859, %v863
        %v925 = vadd.f32 %v924, %v867
        %v926 = vadd.f32 %v925, %v871
        %v927 = vadd.f32 %v926, %v875
        %v928 = vadd.f32 %v927, %v879
        %v929 = vadd.f32 %v928, %v883
        %v930 = vadd.f32 %v929, %v887
        %v931 = vadd.f32 %v930, %v891
        %v932 = vadd.f32 %v931, %v895
        %v933 = vadd.f32 %v932, %v899
        %v934 = vadd.f32 %v933, %v903
        %v935 = vadd.f32 %v934, %v907
        %v936 = vadd.f32 %v935, %v911
        %v937 = vadd.f32 %v936, %v915
        %v938 = vadd.f32 %v937, %v919
        %v939 = vrot.slane %v938, 4
        %v940 = vadd.f32 %v938, %v939
        %v941 = vrot.slane %v940, 2
        %v942 = vadd.f32 %v940, %v941
        %v943 = vrot.slane %v942, 1
        %v944 = vadd.f32 %v942, %v943
        %v945 = vadd.f32 %v860, %v864
        %v946 = vadd.f32 %v945, %v868
        %v947 = vadd.f32 %v946, %v872
        %v948 = vadd.f32 %v947, %v876
        %v949 = vadd.f32 %v948, %v880
        %v950 = vadd.f32 %v949, %v884
        %v951 = vadd.f32 %v950, %v888
        %v952 = vadd.f32 %v951, %v892
        %v953 = vadd.f32 %v952, %v896
        %v954 = vadd.f32 %v953, %v900
        %v955 = vadd.f32 %v954, %v904
        %v956 = vadd.f32 %v955, %v908
        %v957 = vadd.f32 %v956, %v912
        %v958 = vadd.f32 %v957, %v916
        %v959 = vadd.f32 %v958, %v920
        %v960 = vrot.slane %v959, 4
        %v961 = vadd.f32 %v959, %v960
        %v962 = vrot.slane %v961, 2
        %v963 = vadd.f32 %v961, %v962
        %v964 = vrot.slane %v963, 1
        %v965 = vadd.f32 %v963, %v964
        %v966 = vadd.f32 %v861, %v865
        %v967 = vadd.f32 %v966, %v869
        %v968 = vadd.f32 %v967, %v873
        %v969 = vadd.f32 %v968, %v877
        %v970 = vadd.f32 %v969, %v881
        %v971 = vadd.f32 %v970, %v885
        %v972 = vadd.f32 %v971, %v889
        %v973 = vadd.f32 %v972, %v893
        %v974 = vadd.f32 %v973, %v897
        %v975 = vadd.f32 %v974, %v901
        %v976 = vadd.f32 %v975, %v905
        %v977 = vadd.f32 %v976, %v909
        %v978 = vadd.f32 %v977, %v913
        %v979 = vadd.f32 %v978, %v917
        %v980 = vadd.f32 %v979, %v921
        %v981 = vrot.slane %v980, 4
        %v982 = vadd.f32 %v980, %v981
        %v983 = vrot.slane %v982, 2
        %v984 = vadd.f32 %v982, %v983
        %v985 = vrot.slane %v984, 1
        %v986 = vadd.f32 %v984, %v985
        %v987 = vadd.f32 %v862, %v866
        %v988 = vadd.f32 %v987, %v870
        %v989 = vadd.f32 %v988, %v874
        %v990 = vadd.f32 %v989, %v878
        %v991 = vadd.f32 %v990, %v882
        %v992 = vadd.f32 %v991, %v886
        %v993 = vadd.f32 %v992, %v890
        %v994 = vadd.f32 %v993, %v894
        %v995 = vadd.f32 %v994, %v898
        %v996 = vadd.f32 %v995, %v902
        %v997 = vadd.f32 %v996, %v906
        %v998 = vadd.f32 %v997, %v910
        %v999 = vadd.f32 %v998, %v914
        %v1000 = vadd.f32 %v999, %v918
        %v1001 = vadd.f32 %v1000, %v922
        %v1002 = vrot.slane %v1001, 4
        %v1003 = vadd.f32 %v1001, %v1002
        %v1004 = vrot.slane %v1003, 2
        %v1005 = vadd.f32 %v1003, %v1004
        %v1006 = vrot.slane %v1005, 1
        %v1007 = vadd.f32 %v1005, %v1006
        %v1012 = vcombine.low %v944, %v965
        %v1013 = vcombine.low %v986, %v1007
        %v1015 = vunpack.c.l.s4 1966171168
        %v1016 = vunpack.c.0.s8 %v1015
        %v1017 = vlaneseq
        %v1018 = vshrl.u32 %v1017, 7
        %v1019 = vsub.s32 %v1016, %v1018
        %v1020 = vrot.slane %v1012, %v1019
        %v1022 = vunpack.c.l.s4 1966171168
        %v1023 = vunpack.c.0.s8 %v1022
        %v1024 = vlaneseq
        %v1025 = vshrl.u32 %v1024, 7
        %v1026 = vsub.s32 %v1023, %v1025
        %v1027 = vrot.slane %v1013, %v1026
        %v1028 = vcombine.low %v1020, %v1027
        %v1030 = vunpack.c.l.s4 1966171168
        %v1031 = vunpack.c.0.s8 %v1030
        %v1032 = vlaneseq
        %v1033 = vshrl.u32 %v1032, 7
        %v1034 = vsub.s32 %v1031, %v1033
        %v1035 = vrot.slane %v1028, %v1034
        %v1037 = vadd.f32 %v923, %v1035
        %v1038 = vlaneseq
        %vm1039 = vcmp.ge.s32.totalorder %v1038, 0
        %vm1040 = vcmp.lt.s32.totalorder %v1038, 512
        %vm1041 = vmand %vm1039, %vm1040
        %1042 = vst.msk [vmem:[#allocation2] sm:$0xf] %vm1041, %v1037
        %p1043 = scmp.eq.s32.totalorder %s32, 1
        // Predicated region
        $region61: #{tpu_custom_call.1} parent=39 // pred_check
          %p1044 = pneg %p1043
        $region62: #{tpu_custom_call.1} parent=39 // pred_check_branch
          %1046 = sbr.rel (%p1044) target = $region64
        $region63: #{tpu_custom_call.1} parent=39 // pred_region
          %v1047 = vld [vmem:[#allocation2] sm:$0xf]
          %v1048 = vmul.f32 %v1047, 0.00390625
          %v1049 = vld [vmem:[#allocation8] sm:$0xff]
          %v1050 = vld [vmem:[#allocation8 + $0x8] sm:$0xff]
          %v1051 = vld [vmem:[#allocation8 + $0x10] sm:$0xff]
          %v1052 = vld [vmem:[#allocation8 + $0x18] sm:$0xff]
          %v1053 = vld [vmem:[#allocation8 + $0x20] sm:$0xff]
          %v1054 = vld [vmem:[#allocation8 + $0x28] sm:$0xff]
          %v1055 = vld [vmem:[#allocation8 + $0x30] sm:$0xff]
          %v1056 = vld [vmem:[#allocation8 + $0x38] sm:$0xff]
          %v1057 = vld [vmem:[#allocation8 + $0x40] sm:$0xff]
          %v1058 = vld [vmem:[#allocation8 + $0x48] sm:$0xff]
          %v1059 = vld [vmem:[#allocation8 + $0x50] sm:$0xff]
          %v1060 = vld [vmem:[#allocation8 + $0x58] sm:$0xff]
          %v1061 = vld [vmem:[#allocation8 + $0x60] sm:$0xff]
          %v1062 = vld [vmem:[#allocation8 + $0x68] sm:$0xff]
          %v1063 = vld [vmem:[#allocation8 + $0x70] sm:$0xff]
          %v1064 = vld [vmem:[#allocation8 + $0x78] sm:$0xff]
          %v1065 = vld [vmem:[#allocation8 + $0x80] sm:$0xff]
          %v1066 = vld [vmem:[#allocation8 + $0x88] sm:$0xff]
          %v1067 = vld [vmem:[#allocation8 + $0x90] sm:$0xff]
          %v1068 = vld [vmem:[#allocation8 + $0x98] sm:$0xff]
          %v1069 = vld [vmem:[#allocation8 + $0xa0] sm:$0xff]
          %v1070 = vld [vmem:[#allocation8 + $0xa8] sm:$0xff]
          %v1071 = vld [vmem:[#allocation8 + $0xb0] sm:$0xff]
          %v1072 = vld [vmem:[#allocation8 + $0xb8] sm:$0xff]
          %v1073 = vld [vmem:[#allocation8 + $0xc0] sm:$0xff]
          %v1074 = vld [vmem:[#allocation8 + $0xc8] sm:$0xff]
          %v1075 = vld [vmem:[#allocation8 + $0xd0] sm:$0xff]
          %v1076 = vld [vmem:[#allocation8 + $0xd8] sm:$0xff]
          %v1077 = vld [vmem:[#allocation8 + $0xe0] sm:$0xff]
          %v1078 = vld [vmem:[#allocation8 + $0xe8] sm:$0xff]
          %v1079 = vld [vmem:[#allocation8 + $0xf0] sm:$0xff]
          %v1080 = vld [vmem:[#allocation8 + $0xf8] sm:$0xff]
          %v1081 = vld [vmem:[#allocation8 + $0x100] sm:$0xff]
          %v1082 = vld [vmem:[#allocation8 + $0x108] sm:$0xff]
          %v1083 = vld [vmem:[#allocation8 + $0x110] sm:$0xff]
          %v1084 = vld [vmem:[#allocation8 + $0x118] sm:$0xff]
          %v1085 = vld [vmem:[#allocation8 + $0x120] sm:$0xff]
          %v1086 = vld [vmem:[#allocation8 + $0x128] sm:$0xff]
          %v1087 = vld [vmem:[#allocation8 + $0x130] sm:$0xff]
          %v1088 = vld [vmem:[#allocation8 + $0x138] sm:$0xff]
          %v1089 = vld [vmem:[#allocation8 + $0x140] sm:$0xff]
          %v1090 = vld [vmem:[#allocation8 + $0x148] sm:$0xff]
          %v1091 = vld [vmem:[#allocation8 + $0x150] sm:$0xff]
          %v1092 = vld [vmem:[#allocation8 + $0x158] sm:$0xff]
          %v1093 = vld [vmem:[#allocation8 + $0x160] sm:$0xff]
          %v1094 = vld [vmem:[#allocation8 + $0x168] sm:$0xff]
          %v1095 = vld [vmem:[#allocation8 + $0x170] sm:$0xff]
          %v1096 = vld [vmem:[#allocation8 + $0x178] sm:$0xff]
          %v1097 = vld [vmem:[#allocation8 + $0x180] sm:$0xff]
          %v1098 = vld [vmem:[#allocation8 + $0x188] sm:$0xff]
          %v1099 = vld [vmem:[#allocation8 + $0x190] sm:$0xff]
          %v1100 = vld [vmem:[#allocation8 + $0x198] sm:$0xff]
          %v1101 = vld [vmem:[#allocation8 + $0x1a0] sm:$0xff]
          %v1102 = vld [vmem:[#allocation8 + $0x1a8] sm:$0xff]
          %v1103 = vld [vmem:[#allocation8 + $0x1b0] sm:$0xff]
          %v1104 = vld [vmem:[#allocation8 + $0x1b8] sm:$0xff]
          %v1105 = vld [vmem:[#allocation8 + $0x1c0] sm:$0xff]
          %v1106 = vld [vmem:[#allocation8 + $0x1c8] sm:$0xff]
          %v1107 = vld [vmem:[#allocation8 + $0x1d0] sm:$0xff]
          %v1108 = vld [vmem:[#allocation8 + $0x1d8] sm:$0xff]
          %v1109 = vld [vmem:[#allocation8 + $0x1e0] sm:$0xff]
          %v1110 = vld [vmem:[#allocation8 + $0x1e8] sm:$0xff]
          %v1111 = vld [vmem:[#allocation8 + $0x1f0] sm:$0xff]
          %v1112 = vld [vmem:[#allocation8 + $0x1f8] sm:$0xff]
          %v1113 = vld [vmem:[#allocation8 + $0x200] sm:$0xff]
          %v1114 = vld [vmem:[#allocation8 + $0x208] sm:$0xff]
          %v1115 = vld [vmem:[#allocation8 + $0x210] sm:$0xff]
          %v1116 = vld [vmem:[#allocation8 + $0x218] sm:$0xff]
          %v1117 = vld [vmem:[#allocation8 + $0x220] sm:$0xff]
          %v1118 = vld [vmem:[#allocation8 + $0x228] sm:$0xff]
          %v1119 = vld [vmem:[#allocation8 + $0x230] sm:$0xff]
          %v1120 = vld [vmem:[#allocation8 + $0x238] sm:$0xff]
          %v1121 = vld [vmem:[#allocation8 + $0x240] sm:$0xff]
          %v1122 = vld [vmem:[#allocation8 + $0x248] sm:$0xff]
          %v1123 = vld [vmem:[#allocation8 + $0x250] sm:$0xff]
          %v1124 = vld [vmem:[#allocation8 + $0x258] sm:$0xff]
          %v1125 = vld [vmem:[#allocation8 + $0x260] sm:$0xff]
          %v1126 = vld [vmem:[#allocation8 + $0x268] sm:$0xff]
          %v1127 = vld [vmem:[#allocation8 + $0x270] sm:$0xff]
          %v1128 = vld [vmem:[#allocation8 + $0x278] sm:$0xff]
          %v1129 = vld [vmem:[#allocation8 + $0x280] sm:$0xff]
          %v1130 = vld [vmem:[#allocation8 + $0x288] sm:$0xff]
          %v1131 = vld [vmem:[#allocation8 + $0x290] sm:$0xff]
          %v1132 = vld [vmem:[#allocation8 + $0x298] sm:$0xff]
          %v1133 = vld [vmem:[#allocation8 + $0x2a0] sm:$0xff]
          %v1134 = vld [vmem:[#allocation8 + $0x2a8] sm:$0xff]
          %v1135 = vld [vmem:[#allocation8 + $0x2b0] sm:$0xff]
          %v1136 = vld [vmem:[#allocation8 + $0x2b8] sm:$0xff]
          %v1137 = vld [vmem:[#allocation8 + $0x2c0] sm:$0xff]
          %v1138 = vld [vmem:[#allocation8 + $0x2c8] sm:$0xff]
          %v1139 = vld [vmem:[#allocation8 + $0x2d0] sm:$0xff]
          %v1140 = vld [vmem:[#allocation8 + $0x2d8] sm:$0xff]
          %v1141 = vld [vmem:[#allocation8 + $0x2e0] sm:$0xff]
          %v1142 = vld [vmem:[#allocation8 + $0x2e8] sm:$0xff]
          %v1143 = vld [vmem:[#allocation8 + $0x2f0] sm:$0xff]
          %v1144 = vld [vmem:[#allocation8 + $0x2f8] sm:$0xff]
          %v1145 = vld [vmem:[#allocation8 + $0x300] sm:$0xff]
          %v1146 = vld [vmem:[#allocation8 + $0x308] sm:$0xff]
          %v1147 = vld [vmem:[#allocation8 + $0x310] sm:$0xff]
          %v1148 = vld [vmem:[#allocation8 + $0x318] sm:$0xff]
          %v1149 = vld [vmem:[#allocation8 + $0x320] sm:$0xff]
          %v1150 = vld [vmem:[#allocation8 + $0x328] sm:$0xff]
          %v1151 = vld [vmem:[#allocation8 + $0x330] sm:$0xff]
          %v1152 = vld [vmem:[#allocation8 + $0x338] sm:$0xff]
          %v1153 = vld [vmem:[#allocation8 + $0x340] sm:$0xff]
          %v1154 = vld [vmem:[#allocation8 + $0x348] sm:$0xff]
          %v1155 = vld [vmem:[#allocation8 + $0x350] sm:$0xff]
          %v1156 = vld [vmem:[#allocation8 + $0x358] sm:$0xff]
          %v1157 = vld [vmem:[#allocation8 + $0x360] sm:$0xff]
          %v1158 = vld [vmem:[#allocation8 + $0x368] sm:$0xff]
          %v1159 = vld [vmem:[#allocation8 + $0x370] sm:$0xff]
          %v1160 = vld [vmem:[#allocation8 + $0x378] sm:$0xff]
          %v1161 = vld [vmem:[#allocation8 + $0x380] sm:$0xff]
          %v1162 = vld [vmem:[#allocation8 + $0x388] sm:$0xff]
          %v1163 = vld [vmem:[#allocation8 + $0x390] sm:$0xff]
          %v1164 = vld [vmem:[#allocation8 + $0x398] sm:$0xff]
          %v1165 = vld [vmem:[#allocation8 + $0x3a0] sm:$0xff]
          %v1166 = vld [vmem:[#allocation8 + $0x3a8] sm:$0xff]
          %v1167 = vld [vmem:[#allocation8 + $0x3b0] sm:$0xff]
          %v1168 = vld [vmem:[#allocation8 + $0x3b8] sm:$0xff]
          %v1169 = vld [vmem:[#allocation8 + $0x3c0] sm:$0xff]
          %v1170 = vld [vmem:[#allocation8 + $0x3c8] sm:$0xff]
          %v1171 = vld [vmem:[#allocation8 + $0x3d0] sm:$0xff]
          %v1172 = vld [vmem:[#allocation8 + $0x3d8] sm:$0xff]
          %v1173 = vld [vmem:[#allocation8 + $0x3e0] sm:$0xff]
          %v1174 = vld [vmem:[#allocation8 + $0x3e8] sm:$0xff]
          %v1175 = vld [vmem:[#allocation8 + $0x3f0] sm:$0xff]
          %v1176 = vld [vmem:[#allocation8 + $0x3f8] sm:$0xff]
          %v1177 = vld [vmem:[#allocation8 + $0x400] sm:$0xff]
          %v1178 = vld [vmem:[#allocation8 + $0x408] sm:$0xff]
          %v1179 = vld [vmem:[#allocation8 + $0x410] sm:$0xff]
          %v1180 = vld [vmem:[#allocation8 + $0x418] sm:$0xff]
          %v1181 = vld [vmem:[#allocation8 + $0x420] sm:$0xff]
          %v1182 = vld [vmem:[#allocation8 + $0x428] sm:$0xff]
          %v1183 = vld [vmem:[#allocation8 + $0x430] sm:$0xff]
          %v1184 = vld [vmem:[#allocation8 + $0x438] sm:$0xff]
          %v1185 = vld [vmem:[#allocation8 + $0x440] sm:$0xff]
          %v1186 = vld [vmem:[#allocation8 + $0x448] sm:$0xff]
          %v1187 = vld [vmem:[#allocation8 + $0x450] sm:$0xff]
          %v1188 = vld [vmem:[#allocation8 + $0x458] sm:$0xff]
          %v1189 = vld [vmem:[#allocation8 + $0x460] sm:$0xff]
          %v1190 = vld [vmem:[#allocation8 + $0x468] sm:$0xff]
          %v1191 = vld [vmem:[#allocation8 + $0x470] sm:$0xff]
          %v1192 = vld [vmem:[#allocation8 + $0x478] sm:$0xff]
          %v1193 = vld [vmem:[#allocation8 + $0x480] sm:$0xff]
          %v1194 = vld [vmem:[#allocation8 + $0x488] sm:$0xff]
          %v1195 = vld [vmem:[#allocation8 + $0x490] sm:$0xff]
          %v1196 = vld [vmem:[#allocation8 + $0x498] sm:$0xff]
          %v1197 = vld [vmem:[#allocation8 + $0x4a0] sm:$0xff]
          %v1198 = vld [vmem:[#allocation8 + $0x4a8] sm:$0xff]
          %v1199 = vld [vmem:[#allocation8 + $0x4b0] sm:$0xff]
          %v1200 = vld [vmem:[#allocation8 + $0x4b8] sm:$0xff]
          %v1201 = vld [vmem:[#allocation8 + $0x4c0] sm:$0xff]
          %v1202 = vld [vmem:[#allocation8 + $0x4c8] sm:$0xff]
          %v1203 = vld [vmem:[#allocation8 + $0x4d0] sm:$0xff]
          %v1204 = vld [vmem:[#allocation8 + $0x4d8] sm:$0xff]
          %v1205 = vld [vmem:[#allocation8 + $0x4e0] sm:$0xff]
          %v1206 = vld [vmem:[#allocation8 + $0x4e8] sm:$0xff]
          %v1207 = vld [vmem:[#allocation8 + $0x4f0] sm:$0xff]
          %v1208 = vld [vmem:[#allocation8 + $0x4f8] sm:$0xff]
          %v1209 = vld [vmem:[#allocation8 + $0x500] sm:$0xff]
          %v1210 = vld [vmem:[#allocation8 + $0x508] sm:$0xff]
          %v1211 = vld [vmem:[#allocation8 + $0x510] sm:$0xff]
          %v1212 = vld [vmem:[#allocation8 + $0x518] sm:$0xff]
          %v1213 = vld [vmem:[#allocation8 + $0x520] sm:$0xff]
          %v1214 = vld [vmem:[#allocation8 + $0x528] sm:$0xff]
          %v1215 = vld [vmem:[#allocation8 + $0x530] sm:$0xff]
          %v1216 = vld [vmem:[#allocation8 + $0x538] sm:$0xff]
          %v1217 = vld [vmem:[#allocation8 + $0x540] sm:$0xff]
          %v1218 = vld [vmem:[#allocation8 + $0x548] sm:$0xff]
          %v1219 = vld [vmem:[#allocation8 + $0x550] sm:$0xff]
          %v1220 = vld [vmem:[#allocation8 + $0x558] sm:$0xff]
          %v1221 = vld [vmem:[#allocation8 + $0x560] sm:$0xff]
          %v1222 = vld [vmem:[#allocation8 + $0x568] sm:$0xff]
          %v1223 = vld [vmem:[#allocation8 + $0x570] sm:$0xff]
          %v1224 = vld [vmem:[#allocation8 + $0x578] sm:$0xff]
          %v1225 = vld [vmem:[#allocation8 + $0x580] sm:$0xff]
          %v1226 = vld [vmem:[#allocation8 + $0x588] sm:$0xff]
          %v1227 = vld [vmem:[#allocation8 + $0x590] sm:$0xff]
          %v1228 = vld [vmem:[#allocation8 + $0x598] sm:$0xff]
          %v1229 = vld [vmem:[#allocation8 + $0x5a0] sm:$0xff]
          %v1230 = vld [vmem:[#allocation8 + $0x5a8] sm:$0xff]
          %v1231 = vld [vmem:[#allocation8 + $0x5b0] sm:$0xff]
          %v1232 = vld [vmem:[#allocation8 + $0x5b8] sm:$0xff]
          %v1233 = vld [vmem:[#allocation8 + $0x5c0] sm:$0xff]
          %v1234 = vld [vmem:[#allocation8 + $0x5c8] sm:$0xff]
          %v1235 = vld [vmem:[#allocation8 + $0x5d0] sm:$0xff]
          %v1236 = vld [vmem:[#allocation8 + $0x5d8] sm:$0xff]
          %v1237 = vld [vmem:[#allocation8 + $0x5e0] sm:$0xff]
          %v1238 = vld [vmem:[#allocation8 + $0x5e8] sm:$0xff]
          %v1239 = vld [vmem:[#allocation8 + $0x5f0] sm:$0xff]
          %v1240 = vld [vmem:[#allocation8 + $0x5f8] sm:$0xff]
          %v1241 = vld [vmem:[#allocation8 + $0x600] sm:$0xff]
          %v1242 = vld [vmem:[#allocation8 + $0x608] sm:$0xff]
          %v1243 = vld [vmem:[#allocation8 + $0x610] sm:$0xff]
          %v1244 = vld [vmem:[#allocation8 + $0x618] sm:$0xff]
          %v1245 = vld [vmem:[#allocation8 + $0x620] sm:$0xff]
          %v1246 = vld [vmem:[#allocation8 + $0x628] sm:$0xff]
          %v1247 = vld [vmem:[#allocation8 + $0x630] sm:$0xff]
          %v1248 = vld [vmem:[#allocation8 + $0x638] sm:$0xff]
          %v1249 = vld [vmem:[#allocation8 + $0x640] sm:$0xff]
          %v1250 = vld [vmem:[#allocation8 + $0x648] sm:$0xff]
          %v1251 = vld [vmem:[#allocation8 + $0x650] sm:$0xff]
          %v1252 = vld [vmem:[#allocation8 + $0x658] sm:$0xff]
          %v1253 = vld [vmem:[#allocation8 + $0x660] sm:$0xff]
          %v1254 = vld [vmem:[#allocation8 + $0x668] sm:$0xff]
          %v1255 = vld [vmem:[#allocation8 + $0x670] sm:$0xff]
          %v1256 = vld [vmem:[#allocation8 + $0x678] sm:$0xff]
          %v1257 = vld [vmem:[#allocation8 + $0x680] sm:$0xff]
          %v1258 = vld [vmem:[#allocation8 + $0x688] sm:$0xff]
          %v1259 = vld [vmem:[#allocation8 + $0x690] sm:$0xff]
          %v1260 = vld [vmem:[#allocation8 + $0x698] sm:$0xff]
          %v1261 = vld [vmem:[#allocation8 + $0x6a0] sm:$0xff]
          %v1262 = vld [vmem:[#allocation8 + $0x6a8] sm:$0xff]
          %v1263 = vld [vmem:[#allocation8 + $0x6b0] sm:$0xff]
          %v1264 = vld [vmem:[#allocation8 + $0x6b8] sm:$0xff]
          %v1265 = vld [vmem:[#allocation8 + $0x6c0] sm:$0xff]
          %v1266 = vld [vmem:[#allocation8 + $0x6c8] sm:$0xff]
          %v1267 = vld [vmem:[#allocation8 + $0x6d0] sm:$0xff]
          %v1268 = vld [vmem:[#allocation8 + $0x6d8] sm:$0xff]
          %v1269 = vld [vmem:[#allocation8 + $0x6e0] sm:$0xff]
          %v1270 = vld [vmem:[#allocation8 + $0x6e8] sm:$0xff]
          %v1271 = vld [vmem:[#allocation8 + $0x6f0] sm:$0xff]
          %v1272 = vld [vmem:[#allocation8 + $0x6f8] sm:$0xff]
          %v1273 = vld [vmem:[#allocation8 + $0x700] sm:$0xff]
          %v1274 = vld [vmem:[#allocation8 + $0x708] sm:$0xff]
          %v1275 = vld [vmem:[#allocation8 + $0x710] sm:$0xff]
          %v1276 = vld [vmem:[#allocation8 + $0x718] sm:$0xff]
          %v1277 = vld [vmem:[#allocation8 + $0x720] sm:$0xff]
          %v1278 = vld [vmem:[#allocation8 + $0x728] sm:$0xff]
          %v1279 = vld [vmem:[#allocation8 + $0x730] sm:$0xff]
          %v1280 = vld [vmem:[#allocation8 + $0x738] sm:$0xff]
          %v1281 = vld [vmem:[#allocation8 + $0x740] sm:$0xff]
          %v1282 = vld [vmem:[#allocation8 + $0x748] sm:$0xff]
          %v1283 = vld [vmem:[#allocation8 + $0x750] sm:$0xff]
          %v1284 = vld [vmem:[#allocation8 + $0x758] sm:$0xff]
          %v1285 = vld [vmem:[#allocation8 + $0x760] sm:$0xff]
          %v1286 = vld [vmem:[#allocation8 + $0x768] sm:$0xff]
          %v1287 = vld [vmem:[#allocation8 + $0x770] sm:$0xff]
          %v1288 = vld [vmem:[#allocation8 + $0x778] sm:$0xff]
          %v1289 = vld [vmem:[#allocation8 + $0x780] sm:$0xff]
          %v1290 = vld [vmem:[#allocation8 + $0x788] sm:$0xff]
          %v1291 = vld [vmem:[#allocation8 + $0x790] sm:$0xff]
          %v1292 = vld [vmem:[#allocation8 + $0x798] sm:$0xff]
          %v1293 = vld [vmem:[#allocation8 + $0x7a0] sm:$0xff]
          %v1294 = vld [vmem:[#allocation8 + $0x7a8] sm:$0xff]
          %v1295 = vld [vmem:[#allocation8 + $0x7b0] sm:$0xff]
          %v1296 = vld [vmem:[#allocation8 + $0x7b8] sm:$0xff]
          %v1297 = vld [vmem:[#allocation8 + $0x7c0] sm:$0xff]
          %v1298 = vld [vmem:[#allocation8 + $0x7c8] sm:$0xff]
          %v1299 = vld [vmem:[#allocation8 + $0x7d0] sm:$0xff]
          %v1300 = vld [vmem:[#allocation8 + $0x7d8] sm:$0xff]
          %v1301 = vld [vmem:[#allocation8 + $0x7e0] sm:$0xff]
          %v1302 = vld [vmem:[#allocation8 + $0x7e8] sm:$0xff]
          %v1303 = vld [vmem:[#allocation8 + $0x7f0] sm:$0xff]
          %v1304 = vld [vmem:[#allocation8 + $0x7f8] sm:$0xff]
          %v1305 = vld [vmem:[#allocation8 + $0x800] sm:$0xff]
          %v1306 = vld [vmem:[#allocation8 + $0x808] sm:$0xff]
          %v1307 = vld [vmem:[#allocation8 + $0x810] sm:$0xff]
          %v1308 = vld [vmem:[#allocation8 + $0x818] sm:$0xff]
          %v1309 = vld [vmem:[#allocation8 + $0x820] sm:$0xff]
          %v1310 = vld [vmem:[#allocation8 + $0x828] sm:$0xff]
          %v1311 = vld [vmem:[#allocation8 + $0x830] sm:$0xff]
          %v1312 = vld [vmem:[#allocation8 + $0x838] sm:$0xff]
          %v1313 = vld [vmem:[#allocation8 + $0x840] sm:$0xff]
          %v1314 = vld [vmem:[#allocation8 + $0x848] sm:$0xff]
          %v1315 = vld [vmem:[#allocation8 + $0x850] sm:$0xff]
          %v1316 = vld [vmem:[#allocation8 + $0x858] sm:$0xff]
          %v1317 = vld [vmem:[#allocation8 + $0x860] sm:$0xff]
          %v1318 = vld [vmem:[#allocation8 + $0x868] sm:$0xff]
          %v1319 = vld [vmem:[#allocation8 + $0x870] sm:$0xff]
          %v1320 = vld [vmem:[#allocation8 + $0x878] sm:$0xff]
          %v1321 = vld [vmem:[#allocation8 + $0x880] sm:$0xff]
          %v1322 = vld [vmem:[#allocation8 + $0x888] sm:$0xff]
          %v1323 = vld [vmem:[#allocation8 + $0x890] sm:$0xff]
          %v1324 = vld [vmem:[#allocation8 + $0x898] sm:$0xff]
          %v1325 = vld [vmem:[#allocation8 + $0x8a0] sm:$0xff]
          %v1326 = vld [vmem:[#allocation8 + $0x8a8] sm:$0xff]
          %v1327 = vld [vmem:[#allocation8 + $0x8b0] sm:$0xff]
          %v1328 = vld [vmem:[#allocation8 + $0x8b8] sm:$0xff]
          %v1329 = vld [vmem:[#allocation8 + $0x8c0] sm:$0xff]
          %v1330 = vld [vmem:[#allocation8 + $0x8c8] sm:$0xff]
          %v1331 = vld [vmem:[#allocation8 + $0x8d0] sm:$0xff]
          %v1332 = vld [vmem:[#allocation8 + $0x8d8] sm:$0xff]
          %v1333 = vld [vmem:[#allocation8 + $0x8e0] sm:$0xff]
          %v1334 = vld [vmem:[#allocation8 + $0x8e8] sm:$0xff]
          %v1335 = vld [vmem:[#allocation8 + $0x8f0] sm:$0xff]
          %v1336 = vld [vmem:[#allocation8 + $0x8f8] sm:$0xff]
          %v1337 = vld [vmem:[#allocation8 + $0x900] sm:$0xff]
          %v1338 = vld [vmem:[#allocation8 + $0x908] sm:$0xff]
          %v1339 = vld [vmem:[#allocation8 + $0x910] sm:$0xff]
          %v1340 = vld [vmem:[#allocation8 + $0x918] sm:$0xff]
          %v1341 = vld [vmem:[#allocation8 + $0x920] sm:$0xff]
          %v1342 = vld [vmem:[#allocation8 + $0x928] sm:$0xff]
          %v1343 = vld [vmem:[#allocation8 + $0x930] sm:$0xff]
          %v1344 = vld [vmem:[#allocation8 + $0x938] sm:$0xff]
          %v1345 = vld [vmem:[#allocation8 + $0x940] sm:$0xff]
          %v1346 = vld [vmem:[#allocation8 + $0x948] sm:$0xff]
          %v1347 = vld [vmem:[#allocation8 + $0x950] sm:$0xff]
          %v1348 = vld [vmem:[#allocation8 + $0x958] sm:$0xff]
          %v1349 = vld [vmem:[#allocation8 + $0x960] sm:$0xff]
          %v1350 = vld [vmem:[#allocation8 + $0x968] sm:$0xff]
          %v1351 = vld [vmem:[#allocation8 + $0x970] sm:$0xff]
          %v1352 = vld [vmem:[#allocation8 + $0x978] sm:$0xff]
          %v1353 = vld [vmem:[#allocation8 + $0x980] sm:$0xff]
          %v1354 = vld [vmem:[#allocation8 + $0x988] sm:$0xff]
          %v1355 = vld [vmem:[#allocation8 + $0x990] sm:$0xff]
          %v1356 = vld [vmem:[#allocation8 + $0x998] sm:$0xff]
          %v1357 = vld [vmem:[#allocation8 + $0x9a0] sm:$0xff]
          %v1358 = vld [vmem:[#allocation8 + $0x9a8] sm:$0xff]
          %v1359 = vld [vmem:[#allocation8 + $0x9b0] sm:$0xff]
          %v1360 = vld [vmem:[#allocation8 + $0x9b8] sm:$0xff]
          %v1361 = vld [vmem:[#allocation8 + $0x9c0] sm:$0xff]
          %v1362 = vld [vmem:[#allocation8 + $0x9c8] sm:$0xff]
          %v1363 = vld [vmem:[#allocation8 + $0x9d0] sm:$0xff]
          %v1364 = vld [vmem:[#allocation8 + $0x9d8] sm:$0xff]
          %v1365 = vld [vmem:[#allocation8 + $0x9e0] sm:$0xff]
          %v1366 = vld [vmem:[#allocation8 + $0x9e8] sm:$0xff]
          %v1367 = vld [vmem:[#allocation8 + $0x9f0] sm:$0xff]
          %v1368 = vld [vmem:[#allocation8 + $0x9f8] sm:$0xff]
          %v1369 = vld [vmem:[#allocation9] sm:$0x1f]
          %v1371 = vlaneseq
          %v1372 = vshrl.u32 %v1371, 7
          %v1373 = vsub.s32 0, %v1372
          %v1374 = vrot.slane %v1048, %v1373
          %v1375 = vlaneseq
          %v1376 = vshrl.u32 %v1375, 7
          %v1377 = vsub.s32 1, %v1376
          %v1378 = vrot.slane %v1048, %v1377
          %v1379 = vlaneseq
          %v1380 = vshrl.u32 %v1379, 7
          %v1381 = vsub.s32 2, %v1380
          %v1382 = vrot.slane %v1048, %v1381
          %v1383 = vlaneseq
          %v1384 = vshrl.u32 %v1383, 7
          %v1385 = vsub.s32 3, %v1384
          %v1386 = vrot.slane %v1048, %v1385
          %v1392 = vlaneseq
          %v1393 = vshrl.u32 %v1392, 7
          %v1394 = vsub.s32 0, %v1393
          %v1395 = vrot.slane %v1369, %v1394
          %v1396 = vlaneseq
          %v1397 = vshrl.u32 %v1396, 7
          %v1398 = vsub.s32 1, %v1397
          %v1399 = vrot.slane %v1369, %v1398
          %v1400 = vlaneseq
          %v1401 = vshrl.u32 %v1400, 7
          %v1402 = vsub.s32 2, %v1401
          %v1403 = vrot.slane %v1369, %v1402
          %v1404 = vlaneseq
          %v1405 = vshrl.u32 %v1404, 7
          %v1406 = vsub.s32 3, %v1405
          %v1407 = vrot.slane %v1369, %v1406
          %v1408 = vlaneseq
          %v1409 = vshrl.u32 %v1408, 7
          %v1410 = vsub.s32 4, %v1409
          %v1411 = vrot.slane %v1369, %v1410
          %1417 = vmatprep.subr.mxu0 %v1050
          %1418 = vmatpush1.msra.mxu0 %v1049
          %1419 = vmatprep.subr.mxu0 %v1055
          %1420 = vmatpush1.msra.mxu0 %v1054
          %1421 = vmatprep.subr.mxu0 %v1060
          %1422 = vmatpush1.msra.mxu0 %v1059
          %1423 = vmatprep.subr.mxu0 %v1065
          %1424 = vmatpush1.msra.mxu0 %v1064
          %1425 = vmatprep.subr.mxu0 %v1070
          %1426 = vmatpush1.msra.mxu0 %v1069
          %1427 = vmatprep.subr.mxu0 %v1075
          %1428 = vmatpush1.msra.mxu0 %v1074
          %1429 = vmatprep.subr.mxu0 %v1080
          %1430 = vmatpush1.msra.mxu0 %v1079
          %1431 = vmatprep.subr.mxu0 %v1085
          %1432 = vmatpush1.msra.mxu0 %v1084
          %1433 = vmatprep.subr.mxu0 %v1090
          %1434 = vmatpush1.msra.mxu0 %v1089
          %1435 = vmatprep.subr.mxu0 %v1095
          %1436 = vmatpush1.msra.mxu0 %v1094
          %1437 = vmatprep.subr.mxu0 %v1100
          %1438 = vmatpush1.msra.mxu0 %v1099
          %1439 = vmatprep.subr.mxu0 %v1105
          %1440 = vmatpush1.msra.mxu0 %v1104
          %1441 = vmatprep.subr.mxu0 %v1110
          %1442 = vmatpush1.msra.mxu0 %v1109
          %1443 = vmatprep.subr.mxu0 %v1115
          %1444 = vmatpush1.msra.mxu0 %v1114
          %1445 = vmatprep.subr.mxu0 %v1120
          %1446 = vmatpush1.msra.mxu0 %v1119
          %1447 = vmatprep.subr.mxu0 %v1125
          %1448 = vmatpush1.msra.mxu0 %v1124
          %1449 = vmatprep.subr.mxu0 %v1130
          %1450 = vmatpush1.msra.mxu0 %v1129
          %1451 = vmatprep.subr.mxu0 %v1135
          %1452 = vmatpush1.msra.mxu0 %v1134
          %1453 = vmatprep.subr.mxu0 %v1140
          %1454 = vmatpush1.msra.mxu0 %v1139
          %1455 = vmatprep.subr.mxu0 %v1145
          %1456 = vmatpush1.msra.mxu0 %v1144
          %1457 = vmatprep.subr.mxu0 %v1150
          %1458 = vmatpush1.msra.mxu0 %v1149
          %1459 = vmatprep.subr.mxu0 %v1155
          %1460 = vmatpush1.msra.mxu0 %v1154
          %1461 = vmatprep.subr.mxu0 %v1160
          %1462 = vmatpush1.msra.mxu0 %v1159
          %1463 = vmatprep.subr.mxu0 %v1165
          %1464 = vmatpush1.msra.mxu0 %v1164
          %1465 = vmatprep.subr.mxu0 %v1170
          %1466 = vmatpush1.msra.mxu0 %v1169
          %1467 = vmatprep.subr.mxu0 %v1175
          %1468 = vmatpush1.msra.mxu0 %v1174
          %1469 = vmatprep.subr.mxu0 %v1180
          %1470 = vmatpush1.msra.mxu0 %v1179
          %1471 = vmatprep.subr.mxu0 %v1185
          %1472 = vmatpush1.msra.mxu0 %v1184
          %1473 = vmatprep.subr.mxu0 %v1190
          %1474 = vmatpush1.msra.mxu0 %v1189
          %1475 = vmatprep.subr.mxu0 %v1195
          %1476 = vmatpush1.msra.mxu0 %v1194
          %1477 = vmatprep.subr.mxu0 %v1200
          %1478 = vmatpush1.msra.mxu0 %v1199
          %1479 = vmatprep.subr.mxu0 %v1205
          %1480 = vmatpush1.msra.mxu0 %v1204
          %1481 = vmatprep.mubr.f32.mxu0 %v1378
          %1482 = vmatmul.mubr.f32.gmra.mrb[0].mxu0 %v1374
          %v1483 = vpop.f32.mrb[0].mxu0
          %v1484 = vadd.f32 %v1395, %v1483
          %v1485 = vpop.f32.mrb[0].mxu0
          %v1486 = vadd.f32 %v1399, %v1485
          %1487 = vdwg.mxu0
          %1488 = vmatprep.subr.mxu0 %v1210
          %1489 = vmatpush1.msra.mxu0 %v1209
          %1490 = vmatprep.subr.mxu0 %v1215
          %1491 = vmatpush1.msra.mxu0 %v1214
          %1492 = vmatprep.subr.mxu0 %v1220
          %1493 = vmatpush1.msra.mxu0 %v1219
          %1494 = vmatprep.subr.mxu0 %v1225
          %1495 = vmatpush1.msra.mxu0 %v1224
          %1496 = vmatprep.subr.mxu0 %v1230
          %1497 = vmatpush1.msra.mxu0 %v1229
          %1498 = vmatprep.subr.mxu0 %v1235
          %1499 = vmatpush1.msra.mxu0 %v1234
          %1500 = vmatprep.subr.mxu0 %v1240
          %1501 = vmatpush1.msra.mxu0 %v1239
          %1502 = vmatprep.subr.mxu0 %v1245
          %1503 = vmatpush1.msra.mxu0 %v1244
          %1504 = vmatprep.subr.mxu0 %v1250
          %1505 = vmatpush1.msra.mxu0 %v1249
          %1506 = vmatprep.subr.mxu0 %v1255
          %1507 = vmatpush1.msra.mxu0 %v1254
          %1508 = vmatprep.subr.mxu0 %v1260
          %1509 = vmatpush1.msra.mxu0 %v1259
          %1510 = vmatprep.subr.mxu0 %v1265
          %1511 = vmatpush1.msra.mxu0 %v1264
          %1512 = vmatprep.subr.mxu0 %v1270
          %1513 = vmatpush1.msra.mxu0 %v1269
          %1514 = vmatprep.subr.mxu0 %v1275
          %1515 = vmatpush1.msra.mxu0 %v1274
          %1516 = vmatprep.subr.mxu0 %v1280
          %1517 = vmatpush1.msra.mxu0 %v1279
          %1518 = vmatprep.subr.mxu0 %v1285
          %1519 = vmatpush1.msra.mxu0 %v1284
          %1520 = vmatprep.subr.mxu0 %v1290
          %1521 = vmatpush1.msra.mxu0 %v1289
          %1522 = vmatprep.subr.mxu0 %v1295
          %1523 = vmatpush1.msra.mxu0 %v1294
          %1524 = vmatprep.subr.mxu0 %v1300
          %1525 = vmatpush1.msra.mxu0 %v1299
          %1526 = vmatprep.subr.mxu0 %v1305
          %1527 = vmatpush1.msra.mxu0 %v1304
          %1528 = vmatprep.subr.mxu0 %v1310
          %1529 = vmatpush1.msra.mxu0 %v1309
          %1530 = vmatprep.subr.mxu0 %v1315
          %1531 = vmatpush1.msra.mxu0 %v1314
          %1532 = vmatprep.subr.mxu0 %v1320
          %1533 = vmatpush1.msra.mxu0 %v1319
          %1534 = vmatprep.subr.mxu0 %v1325
          %1535 = vmatpush1.msra.mxu0 %v1324
          %1536 = vmatprep.subr.mxu0 %v1330
          %1537 = vmatpush1.msra.mxu0 %v1329
          %1538 = vmatprep.subr.mxu0 %v1335
          %1539 = vmatpush1.msra.mxu0 %v1334
          %1540 = vmatprep.subr.mxu0 %v1340
          %1541 = vmatpush1.msra.mxu0 %v1339
          %1542 = vmatprep.subr.mxu0 %v1345
          %1543 = vmatpush1.msra.mxu0 %v1344
          %1544 = vmatprep.subr.mxu0 %v1350
          %1545 = vmatpush1.msra.mxu0 %v1349
          %1546 = vmatprep.subr.mxu0 %v1355
          %1547 = vmatpush1.msra.mxu0 %v1354
          %1548 = vmatprep.subr.mxu0 %v1360
          %1549 = vmatpush1.msra.mxu0 %v1359
          %1550 = vmatprep.subr.mxu0 %v1365
          %1551 = vmatpush1.msra.mxu0 %v1364
          %1552 = vmatprep.mubr.f32.mxu0 %v1386
          %1553 = vmatmul.mubr.f32.gmra.mrb[0].mxu0 %v1382
          %v1554 = vpop.f32.mrb[0].mxu0
          %v1555 = vadd.f32 %v1484, %v1554
          %v1556 = vpop.f32.mrb[0].mxu0
          %v1557 = vadd.f32 %v1486, %v1556
          %1558 = vdwg.mxu0
          %1559 = vmatprep.subr.mxu0 %v1052
          %1560 = vmatpush1.msra.mxu0 %v1051
          %1561 = vmatprep.subr.mxu0 %v1057
          %1562 = vmatpush1.msra.mxu0 %v1056
          %1563 = vmatprep.subr.mxu0 %v1062
          %1564 = vmatpush1.msra.mxu0 %v1061
          %1565 = vmatprep.subr.mxu0 %v1067
          %1566 = vmatpush1.msra.mxu0 %v1066
          %1567 = vmatprep.subr.mxu0 %v1072
          %1568 = vmatpush1.msra.mxu0 %v1071
          %1569 = vmatprep.subr.mxu0 %v1077
          %1570 = vmatpush1.msra.mxu0 %v1076
          %1571 = vmatprep.subr.mxu0 %v1082
          %1572 = vmatpush1.msra.mxu0 %v1081
          %1573 = vmatprep.subr.mxu0 %v1087
          %1574 = vmatpush1.msra.mxu0 %v1086
          %1575 = vmatprep.subr.mxu0 %v1092
          %1576 = vmatpush1.msra.mxu0 %v1091
          %1577 = vmatprep.subr.mxu0 %v1097
          %1578 = vmatpush1.msra.mxu0 %v1096
          %1579 = vmatprep.subr.mxu0 %v1102
          %1580 = vmatpush1.msra.mxu0 %v1101
          %1581 = vmatprep.subr.mxu0 %v1107
          %1582 = vmatpush1.msra.mxu0 %v1106
          %1583 = vmatprep.subr.mxu0 %v1112
          %1584 = vmatpush1.msra.mxu0 %v1111
          %1585 = vmatprep.subr.mxu0 %v1117
          %1586 = vmatpush1.msra.mxu0 %v1116
          %1587 = vmatprep.subr.mxu0 %v1122
          %1588 = vmatpush1.msra.mxu0 %v1121
          %1589 = vmatprep.subr.mxu0 %v1127
          %1590 = vmatpush1.msra.mxu0 %v1126
          %1591 = vmatprep.subr.mxu0 %v1132
          %1592 = vmatpush1.msra.mxu0 %v1131
          %1593 = vmatprep.subr.mxu0 %v1137
          %1594 = vmatpush1.msra.mxu0 %v1136
          %1595 = vmatprep.subr.mxu0 %v1142
          %1596 = vmatpush1.msra.mxu0 %v1141
          %1597 = vmatprep.subr.mxu0 %v1147
          %1598 = vmatpush1.msra.mxu0 %v1146
          %1599 = vmatprep.subr.mxu0 %v1152
          %1600 = vmatpush1.msra.mxu0 %v1151
          %1601 = vmatprep.subr.mxu0 %v1157
          %1602 = vmatpush1.msra.mxu0 %v1156
          %1603 = vmatprep.subr.mxu0 %v1162
          %1604 = vmatpush1.msra.mxu0 %v1161
          %1605 = vmatprep.subr.mxu0 %v1167
          %1606 = vmatpush1.msra.mxu0 %v1166
          %1607 = vmatprep.subr.mxu0 %v1172
          %1608 = vmatpush1.msra.mxu0 %v1171
          %1609 = vmatprep.subr.mxu0 %v1177
          %1610 = vmatpush1.msra.mxu0 %v1176
          %1611 = vmatprep.subr.mxu0 %v1182
          %1612 = vmatpush1.msra.mxu0 %v1181
          %1613 = vmatprep.subr.mxu0 %v1187
          %1614 = vmatpush1.msra.mxu0 %v1186
          %1615 = vmatprep.subr.mxu0 %v1192
          %1616 = vmatpush1.msra.mxu0 %v1191
          %1617 = vmatprep.subr.mxu0 %v1197
          %1618 = vmatpush1.msra.mxu0 %v1196
          %1619 = vmatprep.subr.mxu0 %v1202
          %1620 = vmatpush1.msra.mxu0 %v1201
          %1621 = vmatprep.subr.mxu0 %v1207
          %1622 = vmatpush1.msra.mxu0 %v1206
          %1623 = vmatprep.mubr.f32.mxu0 %v1378
          %1624 = vmatmul.mubr.f32.gmra.mrb[0].mxu0 %v1374
          %v1625 = vpop.f32.mrb[0].mxu0
          %v1626 = vadd.f32 %v1403, %v1625
          %v1627 = vpop.f32.mrb[0].mxu0
          %v1628 = vadd.f32 %v1407, %v1627
          %1629 = vdwg.mxu0
          %1630 = vmatprep.subr.mxu0 %v1212
          %1631 = vmatpush1.msra.mxu0 %v1211
          %1632 = vmatprep.subr.mxu0 %v1217
          %1633 = vmatpush1.msra.mxu0 %v1216
          %1634 = vmatprep.subr.mxu0 %v1222
          %1635 = vmatpush1.msra.mxu0 %v1221
          %1636 = vmatprep.subr.mxu0 %v1227
          %1637 = vmatpush1.msra.mxu0 %v1226
          %1638 = vmatprep.subr.mxu0 %v1232
          %1639 = vmatpush1.msra.mxu0 %v1231
          %1640 = vmatprep.subr.mxu0 %v1237
          %1641 = vmatpush1.msra.mxu0 %v1236
          %1642 = vmatprep.subr.mxu0 %v1242
          %1643 = vmatpush1.msra.mxu0 %v1241
          %1644 = vmatprep.subr.mxu0 %v1247
          %1645 = vmatpush1.msra.mxu0 %v1246
          %1646 = vmatprep.subr.mxu0 %v1252
          %1647 = vmatpush1.msra.mxu0 %v1251
          %1648 = vmatprep.subr.mxu0 %v1257
          %1649 = vmatpush1.msra.mxu0 %v1256
          %1650 = vmatprep.subr.mxu0 %v1262
          %1651 = vmatpush1.msra.mxu0 %v1261
          %1652 = vmatprep.subr.mxu0 %v1267
          %1653 = vmatpush1.msra.mxu0 %v1266
          %1654 = vmatprep.subr.mxu0 %v1272
          %1655 = vmatpush1.msra.mxu0 %v1271
          %1656 = vmatprep.subr.mxu0 %v1277
          %1657 = vmatpush1.msra.mxu0 %v1276
          %1658 = vmatprep.subr.mxu0 %v1282
          %1659 = vmatpush1.msra.mxu0 %v1281
          %1660 = vmatprep.subr.mxu0 %v1287
          %1661 = vmatpush1.msra.mxu0 %v1286
          %1662 = vmatprep.subr.mxu0 %v1292
          %1663 = vmatpush1.msra.mxu0 %v1291
          %1664 = vmatprep.subr.mxu0 %v1297
          %1665 = vmatpush1.msra.mxu0 %v1296
          %1666 = vmatprep.subr.mxu0 %v1302
          %1667 = vmatpush1.msra.mxu0 %v1301
          %1668 = vmatprep.subr.mxu0 %v1307
          %1669 = vmatpush1.msra.mxu0 %v1306
          %1670 = vmatprep.subr.mxu0 %v1312
          %1671 = vmatpush1.msra.mxu0 %v1311
          %1672 = vmatprep.subr.mxu0 %v1317
          %1673 = vmatpush1.msra.mxu0 %v1316
          %1674 = vmatprep.subr.mxu0 %v1322
          %1675 = vmatpush1.msra.mxu0 %v1321
          %1676 = vmatprep.subr.mxu0 %v1327
          %1677 = vmatpush1.msra.mxu0 %v1326
          %1678 = vmatprep.subr.mxu0 %v1332
          %1679 = vmatpush1.msra.mxu0 %v1331
          %1680 = vmatprep.subr.mxu0 %v1337
          %1681 = vmatpush1.msra.mxu0 %v1336
          %1682 = vmatprep.subr.mxu0 %v1342
          %1683 = vmatpush1.msra.mxu0 %v1341
          %1684 = vmatprep.subr.mxu0 %v1347
          %1685 = vmatpush1.msra.mxu0 %v1346
          %1686 = vmatprep.subr.mxu0 %v1352
          %1687 = vmatpush1.msra.mxu0 %v1351
          %1688 = vmatprep.subr.mxu0 %v1357
          %1689 = vmatpush1.msra.mxu0 %v1356
          %1690 = vmatprep.subr.mxu0 %v1362
          %1691 = vmatpush1.msra.mxu0 %v1361
          %1692 = vmatprep.subr.mxu0 %v1367
          %1693 = vmatpush1.msra.mxu0 %v1366
          %1694 = vmatprep.mubr.f32.mxu0 %v1386
          %1695 = vmatmul.mubr.f32.gmra.mrb[0].mxu0 %v1382
          %v1696 = vpop.f32.mrb[0].mxu0
          %v1697 = vadd.f32 %v1626, %v1696
          %v1698 = vpop.f32.mrb[0].mxu0
          %v1699 = vadd.f32 %v1628, %v1698
          %1700 = vdwg.mxu0
          %1701 = vmatprep.subr.mxu0 0.0
          %1702 = vmatpush1.msra.mxu0 %v1053
          %1703 = vmatprep.subr.mxu0 0.0
          %1704 = vmatpush1.msra.mxu0 %v1058
          %1705 = vmatprep.subr.mxu0 0.0
          %1706 = vmatpush1.msra.mxu0 %v1063
          %1707 = vmatprep.subr.mxu0 0.0
          %1708 = vmatpush1.msra.mxu0 %v1068
          %1709 = vmatprep.subr.mxu0 0.0
          %1710 = vmatpush1.msra.mxu0 %v1073
          %1711 = vmatprep.subr.mxu0 0.0
          %1712 = vmatpush1.msra.mxu0 %v1078
          %1713 = vmatprep.subr.mxu0 0.0
          %1714 = vmatpush1.msra.mxu0 %v1083
          %1715 = vmatprep.subr.mxu0 0.0
          %1716 = vmatpush1.msra.mxu0 %v1088
          %1717 = vmatprep.subr.mxu0 0.0
          %1718 = vmatpush1.msra.mxu0 %v1093
          %1719 = vmatprep.subr.mxu0 0.0
          %1720 = vmatpush1.msra.mxu0 %v1098
          %1721 = vmatprep.subr.mxu0 0.0
          %1722 = vmatpush1.msra.mxu0 %v1103
          %1723 = vmatprep.subr.mxu0 0.0
          %1724 = vmatpush1.msra.mxu0 %v1108
          %1725 = vmatprep.subr.mxu0 0.0
          %1726 = vmatpush1.msra.mxu0 %v1113
          %1727 = vmatprep.subr.mxu0 0.0
          %1728 = vmatpush1.msra.mxu0 %v1118
          %1729 = vmatprep.subr.mxu0 0.0
          %1730 = vmatpush1.msra.mxu0 %v1123
          %1731 = vmatprep.subr.mxu0 0.0
          %1732 = vmatpush1.msra.mxu0 %v1128
          %1733 = vmatprep.subr.mxu0 0.0
          %1734 = vmatpush1.msra.mxu0 %v1133
          %1735 = vmatprep.subr.mxu0 0.0
          %1736 = vmatpush1.msra.mxu0 %v1138
          %1737 = vmatprep.subr.mxu0 0.0
          %1738 = vmatpush1.msra.mxu0 %v1143
          %1739 = vmatprep.subr.mxu0 0.0
          %1740 = vmatpush1.msra.mxu0 %v1148
          %1741 = vmatprep.subr.mxu0 0.0
          %1742 = vmatpush1.msra.mxu0 %v1153
          %1743 = vmatprep.subr.mxu0 0.0
          %1744 = vmatpush1.msra.mxu0 %v1158
          %1745 = vmatprep.subr.mxu0 0.0
          %1746 = vmatpush1.msra.mxu0 %v1163
          %1747 = vmatprep.subr.mxu0 0.0
          %1748 = vmatpush1.msra.mxu0 %v1168
          %1749 = vmatprep.subr.mxu0 0.0
          %1750 = vmatpush1.msra.mxu0 %v1173
          %1751 = vmatprep.subr.mxu0 0.0
          %1752 = vmatpush1.msra.mxu0 %v1178
          %1753 = vmatprep.subr.mxu0 0.0
          %1754 = vmatpush1.msra.mxu0 %v1183
          %1755 = vmatprep.subr.mxu0 0.0
          %1756 = vmatpush1.msra.mxu0 %v1188
          %1757 = vmatprep.subr.mxu0 0.0
          %1758 = vmatpush1.msra.mxu0 %v1193
          %1759 = vmatprep.subr.mxu0 0.0
          %1760 = vmatpush1.msra.mxu0 %v1198
          %1761 = vmatprep.subr.mxu0 0.0
          %1762 = vmatpush1.msra.mxu0 %v1203
          %1763 = vmatprep.subr.mxu0 0.0
          %1764 = vmatpush1.msra.mxu0 %v1208
          %1765 = vmatprep.mubr.f32.mxu0 %v1378
          %1766 = vmatmul.mubr.f32.gmra.mrb[0].mxu0 %v1374
          %v1767 = vpop.f32.mrb[0].mxu0
          %v1768 = vadd.f32 %v1411, %v1767
          %v1769 = vpop.f32.mrb[0].mxu0
          %1770 = vdwg.mxu0
          %1771 = vmatprep.subr.mxu0 0.0
          %1772 = vmatpush1.msra.mxu0 %v1213
          %1773 = vmatprep.subr.mxu0 0.0
          %1774 = vmatpush1.msra.mxu0 %v1218
          %1775 = vmatprep.subr.mxu0 0.0
          %1776 = vmatpush1.msra.mxu0 %v1223
          %1777 = vmatprep.subr.mxu0 0.0
          %1778 = vmatpush1.msra.mxu0 %v1228
          %1779 = vmatprep.subr.mxu0 0.0
          %1780 = vmatpush1.msra.mxu0 %v1233
          %1781 = vmatprep.subr.mxu0 0.0
          %1782 = vmatpush1.msra.mxu0 %v1238
          %1783 = vmatprep.subr.mxu0 0.0
          %1784 = vmatpush1.msra.mxu0 %v1243
          %1785 = vmatprep.subr.mxu0 0.0
          %1786 = vmatpush1.msra.mxu0 %v1248
          %1787 = vmatprep.subr.mxu0 0.0
          %1788 = vmatpush1.msra.mxu0 %v1253
          %1789 = vmatprep.subr.mxu0 0.0
          %1790 = vmatpush1.msra.mxu0 %v1258
          %1791 = vmatprep.subr.mxu0 0.0
          %1792 = vmatpush1.msra.mxu0 %v1263
          %1793 = vmatprep.subr.mxu0 0.0
          %1794 = vmatpush1.msra.mxu0 %v1268
          %1795 = vmatprep.subr.mxu0 0.0
          %1796 = vmatpush1.msra.mxu0 %v1273
          %1797 = vmatprep.subr.mxu0 0.0
          %1798 = vmatpush1.msra.mxu0 %v1278
          %1799 = vmatprep.subr.mxu0 0.0
          %1800 = vmatpush1.msra.mxu0 %v1283
          %1801 = vmatprep.subr.mxu0 0.0
          %1802 = vmatpush1.msra.mxu0 %v1288
          %1803 = vmatprep.subr.mxu0 0.0
          %1804 = vmatpush1.msra.mxu0 %v1293
          %1805 = vmatprep.subr.mxu0 0.0
          %1806 = vmatpush1.msra.mxu0 %v1298
          %1807 = vmatprep.subr.mxu0 0.0
          %1808 = vmatpush1.msra.mxu0 %v1303
          %1809 = vmatprep.subr.mxu0 0.0
          %1810 = vmatpush1.msra.mxu0 %v1308
          %1811 = vmatprep.subr.mxu0 0.0
          %1812 = vmatpush1.msra.mxu0 %v1313
          %1813 = vmatprep.subr.mxu0 0.0
          %1814 = vmatpush1.msra.mxu0 %v1318
          %1815 = vmatprep.subr.mxu0 0.0
          %1816 = vmatpush1.msra.mxu0 %v1323
          %1817 = vmatprep.subr.mxu0 0.0
          %1818 = vmatpush1.msra.mxu0 %v1328
          %1819 = vmatprep.subr.mxu0 0.0
          %1820 = vmatpush1.msra.mxu0 %v1333
          %1821 = vmatprep.subr.mxu0 0.0
          %1822 = vmatpush1.msra.mxu0 %v1338
          %1823 = vmatprep.subr.mxu0 0.0
          %1824 = vmatpush1.msra.mxu0 %v1343
          %1825 = vmatprep.subr.mxu0 0.0
          %1826 = vmatpush1.msra.mxu0 %v1348
          %1827 = vmatprep.subr.mxu0 0.0
          %1828 = vmatpush1.msra.mxu0 %v1353
          %1829 = vmatprep.subr.mxu0 0.0
          %1830 = vmatpush1.msra.mxu0 %v1358
          %1831 = vmatprep.subr.mxu0 0.0
          %1832 = vmatpush1.msra.mxu0 %v1363
          %1833 = vmatprep.subr.mxu0 0.0
          %1834 = vmatpush1.msra.mxu0 %v1368
          %1835 = vmatprep.mubr.f32.mxu0 %v1386
          %1836 = vmatmul.mubr.f32.gmra.mrb[0].mxu0 %v1382
          %v1837 = vpop.f32.mrb[0].mxu0
          %v1838 = vadd.f32 %v1768, %v1837
          %v1839 = vpop.f32.mrb[0].mxu0
          %1840 = vdwg.mxu0
          %v1841 = vmax.f32 %v1555, 0.0
          %v1842 = vmax.f32 %v1557, 0.0
          %v1843 = vmax.f32 %v1697, 0.0
          %v1844 = vmax.f32 %v1699, 0.0
          %v1849 = vcombine.low %v1841, %v1842
          %v1850 = vcombine.low %v1843, %v1844
          %v1852 = vunpack.c.l.s4 1966171168
          %v1853 = vunpack.c.0.s8 %v1852
          %v1854 = vlaneseq
          %v1855 = vshrl.u32 %v1854, 7
          %v1856 = vsub.s32 %v1853, %v1855
          %v1857 = vrot.slane %v1849, %v1856
          %v1859 = vunpack.c.l.s4 1966171168
          %v1860 = vunpack.c.0.s8 %v1859
          %v1861 = vlaneseq
          %v1862 = vshrl.u32 %v1861, 7
          %v1863 = vsub.s32 %v1860, %v1862
          %v1864 = vrot.slane %v1850, %v1863
          %v1865 = vcombine.low %v1857, %v1864
          %v1867 = vunpack.c.l.s4 1966171168
          %v1868 = vunpack.c.0.s8 %v1867
          %v1869 = vlaneseq
          %v1870 = vshrl.u32 %v1869, 7
          %v1871 = vsub.s32 %v1868, %v1870
          %v1872 = vrot.slane %v1865, %v1871
          %1874 = vst.msk [vmem:[%s324] sm:$0xf] %vm1041, %v1872
          %1875 = vst [vmem:[%s330] sm:$0x1] %v1838
        $region64: #{tpu_custom_call.1} parent=39 // pred_fallthru
          _
        %s1876 = sand.u32 %s159, 1
        %s1877 = scalar_lea.sflag [#allocation5], %s1876
        %s1878 = sand.u32 %s159, 1
        %s1879 = smul.addr %s1878, 4
        %s1880 = scalar_lea.vmem [#allocation11], %s1879
        %s1881 = sand.u32 %s185, 1
        %s1882 = scalar_lea.sflag [#allocation13], %s1881
        %s1883 = sand.u32 %s185, 1
        %s1884 = scalar_lea.vmem [#allocation12], %s1883
        // Predicated region
        $region65: #{tpu_custom_call.1} parent=39 // pred_check
          %p1885 = pneg %p169
        $region66: #{tpu_custom_call.1} parent=39 // pred_check_branch
          %1887 = sbr.rel (%p1885) target = $region68
        $region67: #{tpu_custom_call.1} parent=39 // pred_region
          %s1889 = ssub.s32 64, 64
          %1890 = vsyncadd %s1877, %s1889
          %s1891 = smul.addr %s31, 4
          %s1892 = smul.addr %s1891, 16
          %s1893 = scalar_lea.hbm %s5, %s1892
          %s1895 = sshll.u32 %s1880, 4
          %s1896 = int_to_ptr.vmem [resolvable:$true] %s1895
          %1898 = dma.vmem_to_hbm [thread:$0]  %s1896, 64, %s1893, %s1877
        $region68: #{tpu_custom_call.1} parent=39 // pred_fallthru
          _
        // Predicated region
        $region69: #{tpu_custom_call.1} parent=39 // pred_check
          %p1899 = pneg %p195
        $region70: #{tpu_custom_call.1} parent=39 // pred_check_branch
          %1901 = sbr.rel (%p1899) target = $region72
        $region71: #{tpu_custom_call.1} parent=39 // pred_region
          %s1903 = ssub.s32 16, 16
          %1904 = vsyncadd %s1882, %s1903
          %s1905 = smul.addr %s31, 16
          %s1906 = scalar_lea.hbm %s6, %s1905
          %s1908 = sshll.u32 %s1884, 4
          %s1909 = int_to_ptr.vmem [resolvable:$true] %s1908
          %1911 = dma.vmem_to_hbm [thread:$0]  %s1909, 16, %s1906, %s1882
        $region72: #{tpu_custom_call.1} parent=39 // pred_fallthru
          _
      $region40: #{tpu_custom_call.1} parent=5 // pred_fallthru
        _
      %p1912 = scmp.le.s32.totalorder 2, %s22
      // Predicated region
      $region73: #{tpu_custom_call.1} parent=5 // pred_check
        %p1913 = pneg %p1912
      $region74: #{tpu_custom_call.1} parent=5 // pred_check_branch
        %1915 = sbr.rel (%p1913) target = $region76
      $region75: #{tpu_custom_call.1} parent=5 // pred_region
        %s1916 = ssub.s32 %s22, 2
        // Predicated region
        $region77: #{tpu_custom_call.1} parent=75 // pred_check
          %p1917 = pneg %p175
        $region78: #{tpu_custom_call.1} parent=75 // pred_check_branch
          %1919 = sbr.rel (%p1917) target = $region80
        $region79: #{tpu_custom_call.1} parent=75 // pred_region
          %s1920 = sand.u32 %s160, 1
          %s1921 = scalar_lea.sflag [#allocation5], %s1920
          %s1922 = sand.u32 %s160, 1
          %s1923 = smul.addr %s1922, 4
          %s1924 = scalar_lea.vmem [#allocation11], %s1923
          %1925 = dma.done %s1921, 64
        $region80: #{tpu_custom_call.1} parent=75 // pred_fallthru
          _
        // Predicated region
        $region81: #{tpu_custom_call.1} parent=75 // pred_check
          %p1926 = pneg %p201
        $region82: #{tpu_custom_call.1} parent=75 // pred_check_branch
          %1928 = sbr.rel (%p1926) target = $region84
        $region83: #{tpu_custom_call.1} parent=75 // pred_region
          %s1929 = sand.u32 %s186, 1
          %s1930 = scalar_lea.sflag [#allocation13], %s1929
          %s1931 = sand.u32 %s186, 1
          %s1932 = scalar_lea.vmem [#allocation12], %s1931
          %1933 = dma.done %s1930, 16
        $region84: #{tpu_custom_call.1} parent=75 // pred_fallthru
          _
      $region76: #{tpu_custom_call.1} parent=5 // pred_fallthru
        _
    $region6: #{tpu_custom_call.1} parent=1 // loop_footer
      %s26 = sadd.s32 1, %s22
    $region7: #{tpu_custom_call.1} parent=1 // loop_footer_branch
      %21 = sbr.rel target = $region3
    $region8: #{tpu_custom_call.1} parent=1 // loop_exit
      _
    %1934 = vsyncpa [#allocation4], 1
    %s1935 = scalar_lea.sflag [#allocation4], 1
    %1936 = vsyncpa %s1935, 1
    %1937 = vsyncpa [#allocation7], 1
    %1938 = vsyncpa [#allocation10], 1
    %1939 = vsyncpa [#allocation5], 1
    %s1940 = scalar_lea.sflag [#allocation5], 1
    %1941 = vsyncpa %s1940, 1
    %1942 = vsyncpa [#allocation13], 1
    %s1943 = scalar_lea.sflag [#allocation13], 1
    %1944 = vsyncpa %s1943, 1

</llo_original>
